<compile_context>
chip_gen: v7x
topology: tpu7x:2x2x1
jax: 0.10.0
libtpu: 0.0.40
codegen_flags: <defaults>
</compile_context>

<pallas_src>
import functools

import numpy as np
import jax
import jax.numpy as jnp
from jax.experimental import pallas as pl
from jax.experimental.pallas import tpu as pltpu

HIDDEN_CHANNELS = 20     # must be 20 for the module's shapes to be consistent
EDGE_HIDDEN_DIM = 32
EDGE_OUTPUT_DIM = 10     # 10 (one-hot) + 10 (mlp) = 20 combined edge features
RHO_ROW = 4 * EDGE_OUTPUT_DIM          # row 40 of the payload carries plain rho
ACC_W = 48                             # 20 denom + 20 num + 1 rho_sum, padded to mult. of 8


def _gnn_kernel(interval,
                scal_ref,      # SMEM (2,) f32: [a, b]
                src_ref,       # [1, TE] int32 src node id (padding lanes hold N)
                d_ref,         # [1, TE] f32 edge distances
                xs_ref,        # [1, TE] f32 x[src, 0]
                xd_ref,        # [1, TE] f32 x[dst, 0]
                x0_ref,        # [N, 1]  f32 node scalar feature
                W1c_ref,       # [He, 1]
                b1c_ref,       # [He, 1]
                W2e_ref,       # [48, He]  rows 10..19 and 30..39 = W2.T, rest zero
                b2e_ref,       # [48, 1]   rows 10..19 and 30..39 = b2,   rest zero
                g1_ref,        # [1, 20]   gamma1[:, 0]
                g2T_ref,       # [20, 20]  gamma2.T
                bias_ref,      # [1, 20]
                out_ref,       # out [N, 40]  (newh || agg)
                acc_ref):      # scratch [N, 48] f32: denom | num | rho_sum | pad
    t = pl.program_id(0)       # edge-tile index
    n_nodes = acc_ref.shape[0]
    te = d_ref.shape[1]

    @pl.when(t == 0)
    def _init():
        acc_ref[...] = jnp.zeros_like(acc_ref)

    d = d_ref[...]                                               # [1, TE]

    # Edge MLP Linear(1, He) -> ReLU -> Linear(He, 10); the extended W2/b2 put
    # the MLP output in rows 10..19 AND 30..39 of the 48-row payload block
    # (edges on lanes).
    h = jnp.maximum(W1c_ref[...] * d + b1c_ref[...], 0.0)        # [He, TE]
    payload = jnp.dot(W2e_ref[...], h,
                      preferred_element_type=jnp.float32)        # [48, TE]
    payload = payload + b2e_ref[...]

    # One-hot distance bucket lands in rows 0..9 (denom copy) and 20..29 (num
    # copy); row 40 gets a constant 1 so that the rho scale below turns it into
    # plain rho (for the denom==0 fallback).
    bucket = jnp.minimum((d / interval).astype(jnp.int32), 9)    # [1, TE] int32
    rows = jax.lax.broadcasted_iota(jnp.int32, (ACC_W, te), 0)
    onehot = jnp.logical_or(
        jnp.logical_or(rows == bucket, rows == bucket + 2 * EDGE_OUTPUT_DIM),
        rows == RHO_ROW).astype(jnp.float32)
    payload = payload + onehot                                   # [48, TE]

    # rho(h_j, h_j') = |a*h_j - (1-a)*h_j'| ** b   (b > 0); 0**b := 0.
    a = scal_ref[0]
    b = scal_ref[1]
    diff = jnp.abs(a * xs_ref[...] - (1.0 - a) * xd_ref[...])    # [1, TE]
    pos = diff > 0.0
    rho = jnp.where(pos, jnp.exp(b * jnp.log(jnp.where(pos, diff, 1.0))), 0.0)

    # rows 0..19 keep combined (denominator), rows 20..40 get scaled by rho
    # (numerator + rho_sum).  Padding rows 41..47 are identically zero.
    payload = payload * jnp.where(rows >= 2 * EDGE_OUTPUT_DIM, rho, 1.0)

    # Per-tile scatter matrix built in registers from int32 src ids (never
    # touches HBM).  Padding lanes carry src == N and match no node row.
    node_iota = jax.lax.broadcasted_iota(jnp.int32, (n_nodes, te), 0)
    s_tile = (node_iota == src_ref[...]).astype(jnp.float32)     # [N, TE]

    # One fused MXU accumulate per tile: [N, TE] x [TE, 48] -> [N, 48].
    acc_ref[...] += jax.lax.dot_general(
        s_tile, payload, (((1,), (1,)), ((), ())),
        preferred_element_type=jnp.float32)

    @pl.when(t == pl.num_programs(0) - 1)
    def _finalize():
        acc = acc_ref[...]
        denom = acc[:, 0:HIDDEN_CHANNELS]                        # [N, 20]
        num = acc[:, HIDDEN_CHANNELS:2 * HIDDEN_CHANNELS]        # [N, 20]
        rho_sum = acc[:, RHO_ROW:RHO_ROW + 1]                    # [N, 1]
        nz = denom != 0.0
        agg = jnp.where(nz, num / jnp.where(nz, denom, 1.0), 0.01 * rho_sum)

        z = (x0_ref[...] * g1_ref[...]
             + jnp.dot(agg, g2T_ref[...], preferred_element_type=jnp.float32)
             + bias_ref[...])
        out_ref[:, 0:HIDDEN_CHANNELS] = jax.nn.sigmoid(z)
        out_ref[:, HIDDEN_CHANNELS:2 * HIDDEN_CHANNELS] = agg


def couche_initiale_gnn(x, edge_index, edge_attr, params, threshold,
                        tile_edges=512):
    """Returns (new_x [N,2,20], edge_index, edge_attr) like the torch module."""
    assert tile_edges % 128 == 0, "edge tile must be lane-aligned (multiple of 128)"
    x = jnp.asarray(x, jnp.float32)
    edge_attr = jnp.asarray(edge_attr, jnp.float32)
    N = x.shape[0]
    d_flat = edge_attr.reshape(-1)
    E = d_flat.shape[0]
    He = params["W1"].shape[1]

    TE = tile_edges
    T = max(1, (E + TE - 1) // TE)
    E_pad = T * TE
    pad = E_pad - E

    src = jnp.asarray(edge_index[0], jnp.int32)
    dst = jnp.asarray(edge_index[1], jnp.int32)
    x0col = x[:, 0:1]                                            # [N, 1]
    xs = x[:, 0][src]                                            # [E] gather in XLA
    xd = x[:, 0][dst]                                            # [E]

    # lane-major, padded edge arrays (padding lanes: src=N -> matches no node)
    src_p = jnp.pad(src, (0, pad), constant_values=N)[None, :]   # [1, E_pad] int32
    d_p = jnp.pad(d_flat, (0, pad))[None, :]                     # [1, E_pad]
    xs_p = jnp.pad(xs, (0, pad))[None, :]
    xd_p = jnp.pad(xd, (0, pad))[None, :]

    # parameters reshaped for the edges-on-lanes layout
    W1c = jnp.transpose(params["W1"])                            # [He, 1]
    b1c = params["b1"][:, None]                                  # [He, 1]
    W2T = jnp.transpose(params["W2"])                            # [10, He]
    W2e = (jnp.zeros((ACC_W, He), jnp.float32)
           .at[EDGE_OUTPUT_DIM:2 * EDGE_OUTPUT_DIM, :].set(W2T)
           .at[3 * EDGE_OUTPUT_DIM:4 * EDGE_OUTPUT_DIM, :].set(W2T))
    b2e = (jnp.zeros((ACC_W, 1), jnp.float32)
           .at[EDGE_OUTPUT_DIM:2 * EDGE_OUTPUT_DIM, 0].set(params["b2"])
           .at[3 * EDGE_OUTPUT_DIM:4 * EDGE_OUTPUT_DIM, 0].set(params["b2"]))
    g1 = params["gamma1"][:, 0][None, :]                         # [1, 20]
    g2T = jnp.transpose(params["gamma2"])                        # [20, 20]
    bias = params["bias"][None, :]                               # [1, 20]
    scal = jnp.stack([params["a"].reshape(()), params["b"].reshape(())]).astype(jnp.float32)

    interval = float(np.float32(threshold) / np.float32(10.0))
    kernel = functools.partial(_gnn_kernel, interval)

    edge_spec = lambda t: (0, t)          # walk edge tiles
    const_spec = lambda t: (0, 0)         # stay VMEM-resident across the grid

    out = pl.pallas_call(
        kernel,
        out_shape=jax.ShapeDtypeStruct((N, 2 * HIDDEN_CHANNELS), jnp.float32),
        grid=(T,),
        in_specs=[
            pl.BlockSpec(memory_space=pltpu.MemorySpace.SMEM),           # scal [a, b]
            pl.BlockSpec((1, TE), edge_spec),                            # src
            pl.BlockSpec((1, TE), edge_spec),                            # d
            pl.BlockSpec((1, TE), edge_spec),                            # x_src
            pl.BlockSpec((1, TE), edge_spec),                            # x_dst
            pl.BlockSpec((N, 1), const_spec),                            # x0
            pl.BlockSpec((He, 1), const_spec),                           # W1c
            pl.BlockSpec((He, 1), const_spec),                           # b1c
            pl.BlockSpec((ACC_W, He), const_spec),                       # W2e
            pl.BlockSpec((ACC_W, 1), const_spec),                        # b2e
            pl.BlockSpec((1, HIDDEN_CHANNELS), const_spec),              # g1
            pl.BlockSpec((HIDDEN_CHANNELS, HIDDEN_CHANNELS), const_spec),# g2T
            pl.BlockSpec((1, HIDDEN_CHANNELS), const_spec),              # bias
        ],
        out_specs=pl.BlockSpec((N, 2 * HIDDEN_CHANNELS), const_spec),
        scratch_shapes=[pltpu.VMEM((N, ACC_W), jnp.float32)],            # denom|num|rho_sum
        compiler_params=pltpu.CompilerParams(
            dimension_semantics=("arbitrary",),
            vmem_limit_bytes=32 * 1024 * 1024),
    )(scal, src_p, d_p, xs_p, xd_p, x0col,
      W1c, b1c, W2e, b2e, g1, g2T, bias)

    new_x = out.reshape(N, 2, HIDDEN_CHANNELS)   # [:,0,:]=new_h, [:,1,:]=agg
    return new_x, edge_index, edge_attr


# ---------------- pure NumPy reference (mirrors the torch loops) ----------------
def reference_forward(x, edge_index, edge_attr, p, threshold):
    x = np.asarray(x, np.float64)
    ei = np.asarray(edge_index)
    ea = np.asarray(edge_attr, np.float64).reshape(-1, 1)
    a = float(p["a"]); b = float(p["b"])
    W1 = np.asarray(p["W1"], np.float64); b1 = np.asarray(p["b1"], np.float64)
    W2 = np.asarray(p["W2"], np.float64); b2 = np.asarray(p["b2"], np.float64)
    g1 = np.asarray(p["gamma1"], np.float64)
    g2 = np.asarray(p["gamma2"], np.float64)
    bias = np.asarray(p["bias"], np.float64)
    E, N = ea.shape[0], x.shape[0]

    mlp = np.maximum(ea @ W1 + b1, 0.0) @ W2 + b2
    interval = np.float32(threshold) / np.float32(10.0)
    onehot = np.zeros((E, 10), np.float64)
    for e in range(E):
        k = int(np.float32(ea[e, 0]) / interval)
        onehot[e, min(k, 9)] = 1.0
    combined = np.concatenate([onehot, mlp], axis=1)

    new_feats = np.zeros((N, 20), np.float64)
    for j in range(N):
        nbrs = np.unique(ei[1][ei[0] == j])
        sumfeat = np.zeros((20,), np.float64)
        for jp in nbrs:
            rho = abs(a * x[j, 0] - (1 - a) * x[jp, 0]) ** b
            sum_w = np.zeros((20,), np.float64)
            for jpp in nbrs:
                eidx = np.nonzero((ei[0] == j) & (ei[1] == jpp))[0][0]
                sum_w += combined[eidx]
            eidx = np.nonzero((ei[0] == j) & (ei[1] == jp))[0][0]
            eattr = combined[eidx]
            w_tilde = np.where(sum_w != 0, eattr / np.where(sum_w != 0, sum_w, 1.0), 0.01)
            sumfeat += rho * w_tilde
        new_feats[j] = sumfeat

    z = x[:, 0:1] * g1[:, 0][None, :] + new_feats @ g2.T + bias[None, :]
    new_h = 1.0 / (1.0 + np.exp(-z))
    out = np.zeros((N, 2, 20), np.float64)
    out[:, 0, :] = new_h
    out[:, 1, :] = new_feats
    return out


if __name__ == "__main__":
    threshold = 5.0
    N = 48
    He = EDGE_HIDDEN_DIM

    key = jax.random.PRNGKey(0)
    ks = jax.random.split(key, 12)

    params = {
        "a": jax.random.uniform(ks[0], ()),                                  # torch.rand(1)
        "b": jax.random.uniform(ks[1], ()) + 1.0,                            # torch.rand(1)+1
        "gamma1": jax.random.uniform(ks[2], (HIDDEN_CHANNELS, 1)),
        "gamma2": jax.random.uniform(ks[3], (HIDDEN_CHANNELS, HIDDEN_CHANNELS)),
        "bias": jax.random.uniform(ks[4], (HIDDEN_CHANNELS,)),
        "W1": jax.random.uniform(ks[5], (1, He), minval=-1.0, maxval=1.0),   # Linear(1, He)
        "b1": jax.random.uniform(ks[6], (He,), minval=-1.0, maxval=1.0),
        "W2": jax.random.uniform(ks[7], (He, EDGE_OUTPUT_DIM), minval=-0.2, maxval=0.2),
        "b2": jax.random.uniform(ks[8], (EDGE_OUTPUT_DIM,), minval=-0.2, maxval=0.2),
    }
    params = {k: jnp.asarray(v, jnp.float32) for k, v in params.items()}

    # already-coalesced directed graph: node j -> (j+1)%N, (j+3)%N, (j+7)%N
    src_list, dst_list = [], []
    for j in range(N):
        for t in sorted({(j + 1) % N, (j + 3) % N, (j + 7) % N}):
            src_list.append(j)
            dst_list.append(t)
    edge_index = jnp.array([src_list, dst_list], dtype=jnp.int32)            # [2, 144]
    E = edge_index.shape[1]

    x = jax.random.uniform(ks[9], (N, 2), dtype=jnp.float32)                 # x[:,0] used
    edge_attr = jax.random.uniform(ks[10], (E, 1), minval=0.1, maxval=threshold,
                                   dtype=jnp.float32)

    # tile_edges=128 so the 144-edge graph exercises 2 edge tiles + padding
    new_x, ei_out, ea_out = couche_initiale_gnn(x, edge_index, edge_attr, params,
                                                threshold, tile_edges=128)
    new_x = jax.block_until_ready(new_x)

    ref = reference_forward(x, edge_index, edge_attr, params, threshold)
    np.testing.assert_allclose(np.asarray(new_x), ref, rtol=2e-3, atol=1e-4)

    print("KERNEL_OK")
</pallas_src>

<mosaic_0001>
module attributes {stable_mosaic.version = 11 : i64} {
  func.func @_gnn_kernel(%arg0: i32, %arg1: memref<2xf32, #tpu.memory_space<smem>>, %arg2: memref<1x128xi32, #tpu.memory_space<vmem>>, %arg3: memref<1x128xf32, #tpu.memory_space<vmem>>, %arg4: memref<1x128xf32, #tpu.memory_space<vmem>>, %arg5: memref<1x128xf32, #tpu.memory_space<vmem>>, %arg6: memref<48x1xf32, #tpu.memory_space<vmem>>, %arg7: memref<32x1xf32, #tpu.memory_space<vmem>>, %arg8: memref<32x1xf32, #tpu.memory_space<vmem>>, %arg9: memref<48x32xf32, #tpu.memory_space<vmem>>, %arg10: memref<48x1xf32, #tpu.memory_space<vmem>>, %arg11: memref<1x20xf32, #tpu.memory_space<vmem>>, %arg12: memref<20x20xf32, #tpu.memory_space<vmem>>, %arg13: memref<1x20xf32, #tpu.memory_space<vmem>>, %arg14: memref<48x40xf32, #tpu.memory_space<vmem>>, %arg15: memref<48x48xf32, #tpu.memory_space<vmem>>) attributes {dimension_semantics = [#tpu.dimension_semantics<arbitrary>], iteration_bounds = array<i64: 2>, scalar_prefetch = 0 : i64, scratch_operands = 1 : i64, tpu.core_type = #tpu.core_type<tc>, window_params = [{transform_indices = @transform_0, window_bounds = array<i64: 2>}, {transform_indices = @transform_1, window_bounds = array<i64: 1, 128>}, {transform_indices = @transform_2, window_bounds = array<i64: 1, 128>}, {transform_indices = @transform_3, window_bounds = array<i64: 1, 128>}, {transform_indices = @transform_4, window_bounds = array<i64: 1, 128>}, {pipeline_mode = #tpu.pipeline_mode<synchronous>, transform_indices = @transform_5, window_bounds = array<i64: 48, 1>}, {pipeline_mode = #tpu.pipeline_mode<synchronous>, transform_indices = @transform_6, window_bounds = array<i64: 32, 1>}, {pipeline_mode = #tpu.pipeline_mode<synchronous>, transform_indices = @transform_7, window_bounds = array<i64: 32, 1>}, {pipeline_mode = #tpu.pipeline_mode<synchronous>, transform_indices = @transform_8, window_bounds = array<i64: 48, 32>}, {pipeline_mode = #tpu.pipeline_mode<synchronous>, transform_indices = @transform_9, window_bounds = array<i64: 48, 1>}, {pipeline_mode = #tpu.pipeline_mode<synchronous>, transform_indices = @transform_10, window_bounds = array<i64: 1, 20>}, {pipeline_mode = #tpu.pipeline_mode<synchronous>, transform_indices = @transform_11, window_bounds = array<i64: 20, 20>}, {pipeline_mode = #tpu.pipeline_mode<synchronous>, transform_indices = @transform_12, window_bounds = array<i64: 1, 20>}, {pipeline_mode = #tpu.pipeline_mode<synchronous>, transform_indices = @transform_13, window_bounds = array<i64: 48, 40>}]} {
    %c0_i32 = arith.constant 0 : i32
    %0 = arith.cmpi eq, %arg0, %c0_i32 : i32
    %1 = arith.extui %0 : i1 to i32
    %c0_i32_0 = arith.constant 0 : i32
    %2 = arith.cmpi ne, %1, %c0_i32_0 : i32
    scf.if %2 {
      %cst_31 = arith.constant 0.000000e+00 : f32
      %78 = vector.broadcast %cst_31 : f32 to vector<48x48xf32>
      %c0_32 = arith.constant 0 : index
      %c0_33 = arith.constant 0 : index
      %79 = vector.load %arg15[%c0_32, %c0_33] : memref<48x48xf32, #tpu.memory_space<vmem>>, vector<48x48xf32>
      tpu.vector_store %arg15[%c0_32, %c0_33], %78 {strides = array<i32>} : memref<48x48xf32, #tpu.memory_space<vmem>>, vector<48x48xf32>,
    } else {
    }
    %c0 = arith.constant 0 : index
    %c0_1 = arith.constant 0 : index
    %3 = vector.load %arg3[%c0, %c0_1] : memref<1x128xf32, #tpu.memory_space<vmem>>, vector<1x128xf32>
    %c0_2 = arith.constant 0 : index
    %c0_3 = arith.constant 0 : index
    %4 = vector.load %arg7[%c0_2, %c0_3] : memref<32x1xf32, #tpu.memory_space<vmem>>, vector<32x1xf32>
    %5 = vector.broadcast %4 : vector<32x1xf32> to vector<32x128xf32>
    %6 = vector.broadcast %3 : vector<1x128xf32> to vector<32x128xf32>
    %7 = arith.mulf %5, %6 : vector<32x128xf32>
    %c0_4 = arith.constant 0 : index
    %c0_5 = arith.constant 0 : index
    %8 = vector.load %arg8[%c0_4, %c0_5] : memref<32x1xf32, #tpu.memory_space<vmem>>, vector<32x1xf32>
    %9 = vector.broadcast %8 : vector<32x1xf32> to vector<32x128xf32>
    %10 = arith.addf %7, %9 : vector<32x128xf32>
    %cst = arith.constant 0.000000e+00 : f32
    %11 = vector.broadcast %cst : f32 to vector<32x128xf32>
    %12 = arith.maximumf %10, %11 : vector<32x128xf32>
    %c0_6 = arith.constant 0 : index
    %c0_7 = arith.constant 0 : index
    %13 = vector.load %arg9[%c0_6, %c0_7] : memref<48x32xf32, #tpu.memory_space<vmem>>, vector<48x32xf32>
    %cst_8 = arith.constant dense<0.000000e+00> : vector<48x128xf32>
    %14 = tpu.matmul %13, %12, %cst_8 {dimension_numbers = #tpu.dot_dimension_numbers<[1], [0], [0], [1], [0, 0, 1, 1], [], []>} : vector<48x32xf32>, vector<32x128xf32>, vector<48x128xf32> -> vector<48x128xf32>
    %c0_9 = arith.constant 0 : index
    %c0_10 = arith.constant 0 : index
    %15 = vector.load %arg10[%c0_9, %c0_10] : memref<48x1xf32, #tpu.memory_space<vmem>>, vector<48x1xf32>
    %16 = vector.broadcast %15 : vector<48x1xf32> to vector<48x128xf32>
    %17 = arith.addf %14, %16 : vector<48x128xf32>
    %cst_11 = arith.constant 5.000000e-01 : f32
    %18 = vector.broadcast %cst_11 : f32 to vector<1x128xf32>
    %19 = arith.divf %3, %18 : vector<1x128xf32>
    %20 = arith.fptosi %19 : vector<1x128xf32> to vector<1x128xi32>
    %c9_i32 = arith.constant 9 : i32
    %21 = vector.broadcast %c9_i32 : i32 to vector<1x128xi32>
    %22 = arith.minsi %20, %21 : vector<1x128xi32>
    %23 = tpu.iota {dimensions = array<i32: 0>} : vector<48x128xi32>
    %24 = vector.broadcast %22 : vector<1x128xi32> to vector<48x128xi32>
    %25 = arith.cmpi eq, %23, %24 : vector<48x128xi32>
    %c20_i32 = arith.constant 20 : i32
    %26 = vector.broadcast %c20_i32 : i32 to vector<1x128xi32>
    %27 = arith.addi %22, %26 : vector<1x128xi32>
    %28 = vector.broadcast %27 : vector<1x128xi32> to vector<48x128xi32>
    %29 = arith.cmpi eq, %23, %28 : vector<48x128xi32>
    %30 = arith.ori %25, %29 : vector<48x128xi1>
    %c40_i32 = arith.constant 40 : i32
    %31 = vector.broadcast %c40_i32 : i32 to vector<48x128xi32>
    %32 = arith.cmpi eq, %23, %31 : vector<48x128xi32>
    %33 = arith.ori %30, %32 : vector<48x128xi1>
    %34 = arith.extui %33 : vector<48x128xi1> to vector<48x128xi32>
    %35 = arith.sitofp %34 : vector<48x128xi32> to vector<48x128xf32>
    %36 = arith.addf %17, %35 : vector<48x128xf32>
    %c0_12 = arith.constant 0 : index
    %37 = memref.load %arg1[%c0_12] : memref<2xf32, #tpu.memory_space<smem>>
    %c1 = arith.constant 1 : index
    %38 = memref.load %arg1[%c1] : memref<2xf32, #tpu.memory_space<smem>>
    %c0_13 = arith.constant 0 : index
    %c0_14 = arith.constant 0 : index
    %39 = vector.load %arg4[%c0_13, %c0_14] : memref<1x128xf32, #tpu.memory_space<vmem>>, vector<1x128xf32>
    %40 = vector.broadcast %37 : f32 to vector<1x128xf32>
    %41 = arith.mulf %40, %39 : vector<1x128xf32>
    %cst_15 = arith.constant 1.000000e+00 : f32
    %42 = arith.subf %cst_15, %37 : f32
    %c0_16 = arith.constant 0 : index
    %c0_17 = arith.constant 0 : index
    %43 = vector.load %arg5[%c0_16, %c0_17] : memref<1x128xf32, #tpu.memory_space<vmem>>, vector<1x128xf32>
    %44 = vector.broadcast %42 : f32 to vector<1x128xf32>
    %45 = arith.mulf %44, %43 : vector<1x128xf32>
    %46 = arith.subf %41, %45 : vector<1x128xf32>
    %47 = math.absf %46 : vector<1x128xf32>
    %cst_18 = arith.constant 0.000000e+00 : f32
    %48 = vector.broadcast %cst_18 : f32 to vector<1x128xf32>
    %49 = arith.cmpf ogt, %47, %48 : vector<1x128xf32>
    %cst_19 = arith.constant 1.000000e+00 : f32
    %50 = vector.broadcast %cst_19 : f32 to vector<1x128xf32>
    %51 = arith.select %49, %47, %50 : vector<1x128xi1>, vector<1x128xf32>
    %52 = math.log %51 : vector<1x128xf32>
    %53 = vector.broadcast %38 : f32 to vector<1x128xf32>
    %54 = arith.mulf %53, %52 : vector<1x128xf32>
    %55 = math.exp %54 : vector<1x128xf32>
    %cst_20 = arith.constant 0.000000e+00 : f32
    %56 = vector.broadcast %cst_20 : f32 to vector<1x128xf32>
    %57 = arith.select %49, %55, %56 : vector<1x128xi1>, vector<1x128xf32>
    %c20_i32_21 = arith.constant 20 : i32
    %58 = vector.broadcast %c20_i32_21 : i32 to vector<48x128xi32>
    %59 = arith.cmpi sge, %23, %58 : vector<48x128xi32>
    %cst_22 = arith.constant 1.000000e+00 : f32
    %60 = vector.shape_cast %57 : vector<1x128xf32> to vector<1x128xf32>
    %61 = vector.broadcast %60 : vector<1x128xf32> to vector<48x128xf32>
    %62 = vector.broadcast %cst_22 : f32 to vector<48x128xf32>
    %63 = arith.select %59, %61, %62 : vector<48x128xi1>, vector<48x128xf32>
    %64 = arith.mulf %36, %63 : vector<48x128xf32>
    %65 = tpu.iota {dimensions = array<i32: 0>} : vector<48x128xi32>
    %c0_23 = arith.constant 0 : index
    %c0_24 = arith.constant 0 : index
    %66 = vector.load %arg2[%c0_23, %c0_24] : memref<1x128xi32, #tpu.memory_space<vmem>>, vector<1x128xi32>
    %67 = vector.broadcast %66 : vector<1x128xi32> to vector<48x128xi32>
    %68 = arith.cmpi eq, %65, %67 : vector<48x128xi32>
    %69 = arith.extui %68 : vector<48x128xi1> to vector<48x128xi32>
    %70 = arith.sitofp %69 : vector<48x128xi32> to vector<48x128xf32>
    %c0_25 = arith.constant 0 : index
    %c0_26 = arith.constant 0 : index
    %71 = vector.load %arg15[%c0_25, %c0_26] : memref<48x48xf32, #tpu.memory_space<vmem>>, vector<48x48xf32>
    %cst_27 = arith.constant dense<0.000000e+00> : vector<48x48xf32>
    %72 = tpu.matmul %70, %64, %cst_27 {dimension_numbers = #tpu.dot_dimension_numbers<[1], [1], [0], [0], [0, 0, 1, 0], [], []>} : vector<48x128xf32>, vector<48x128xf32>, vector<48x48xf32> -> vector<48x48xf32>
    %73 = arith.addf %71, %72 : vector<48x48xf32>
    %c0_28 = arith.constant 0 : index
    %c0_29 = arith.constant 0 : index
    %74 = vector.load %arg15[%c0_28, %c0_29] : memref<48x48xf32, #tpu.memory_space<vmem>>, vector<48x48xf32>
    tpu.vector_store %arg15[%c0_28, %c0_29], %73 {strides = array<i32>} : memref<48x48xf32, #tpu.memory_space<vmem>>, vector<48x48xf32>,
    %c1_i32 = arith.constant 1 : i32
    %75 = arith.cmpi eq, %arg0, %c1_i32 : i32
    %76 = arith.extui %75 : i1 to i32
    %c0_i32_30 = arith.constant 0 : i32
    %77 = arith.cmpi ne, %76, %c0_i32_30 : i32
    scf.if %77 {
      %c0_31 = arith.constant 0 : index
      %c0_32 = arith.constant 0 : index
      %78 = vector.load %arg15[%c0_31, %c0_32] : memref<48x48xf32, #tpu.memory_space<vmem>>, vector<48x48xf32>
      %79 = vector.extract_strided_slice %78 {offsets = [0, 0], sizes = [48, 20], strides = [1, 1]} : vector<48x48xf32> to vector<48x20xf32>
      %80 = vector.extract_strided_slice %78 {offsets = [0, 20], sizes = [48, 20], strides = [1, 1]} : vector<48x48xf32> to vector<48x20xf32>
      %81 = vector.extract_strided_slice %78 {offsets = [0, 40], sizes = [48, 1], strides = [1, 1]} : vector<48x48xf32> to vector<48x1xf32>
      %cst_33 = arith.constant 0.000000e+00 : f32
      %82 = vector.broadcast %cst_33 : f32 to vector<48x20xf32>
      %83 = arith.cmpf one, %79, %82 : vector<48x20xf32>
      %cst_34 = arith.constant 1.000000e+00 : f32
      %84 = vector.broadcast %cst_34 : f32 to vector<48x20xf32>
      %85 = arith.select %83, %79, %84 : vector<48x20xi1>, vector<48x20xf32>
      %86 = arith.divf %80, %85 : vector<48x20xf32>
      %cst_35 = arith.constant 0.00999999977 : f32
      %87 = vector.broadcast %cst_35 : f32 to vector<48x1xf32>
      %88 = arith.mulf %87, %81 : vector<48x1xf32>
      %89 = vector.shape_cast %88 : vector<48x1xf32> to vector<48x1xf32>
      %90 = vector.broadcast %89 : vector<48x1xf32> to vector<48x20xf32>
      %91 = arith.select %83, %86, %90 : vector<48x20xi1>, vector<48x20xf32>
      %c0_36 = arith.constant 0 : index
      %c0_37 = arith.constant 0 : index
      %92 = vector.load %arg6[%c0_36, %c0_37] : memref<48x1xf32, #tpu.memory_space<vmem>>, vector<48x1xf32>
      %c0_38 = arith.constant 0 : index
      %c0_39 = arith.constant 0 : index
      %93 = vector.load %arg11[%c0_38, %c0_39] : memref<1x20xf32, #tpu.memory_space<vmem>>, vector<1x20xf32>
      %94 = vector.broadcast %92 : vector<48x1xf32> to vector<48x20xf32>
      %95 = vector.broadcast %93 : vector<1x20xf32> to vector<48x20xf32>
      %96 = arith.mulf %94, %95 : vector<48x20xf32>
      %c0_40 = arith.constant 0 : index
      %c0_41 = arith.constant 0 : index
      %97 = vector.load %arg12[%c0_40, %c0_41] : memref<20x20xf32, #tpu.memory_space<vmem>>, vector<20x20xf32>
      %cst_42 = arith.constant dense<0.000000e+00> : vector<48x20xf32>
      %98 = tpu.matmul %91, %97, %cst_42 {dimension_numbers = #tpu.dot_dimension_numbers<[1], [0], [0], [1], [0, 0, 1, 1], [], []>} : vector<48x20xf32>, vector<20x20xf32>, vector<48x20xf32> -> vector<48x20xf32>
      %99 = arith.addf %96, %98 : vector<48x20xf32>
      %c0_43 = arith.constant 0 : index
      %c0_44 = arith.constant 0 : index
      %100 = vector.load %arg13[%c0_43, %c0_44] : memref<1x20xf32, #tpu.memory_space<vmem>>, vector<1x20xf32>
      %101 = vector.broadcast %100 : vector<1x20xf32> to vector<48x20xf32>
      %102 = arith.addf %99, %101 : vector<48x20xf32>
      %103 = arith.negf %102 : vector<48x20xf32>
      %104 = math.exp %103 : vector<48x20xf32>
      %cst_45 = arith.constant 1.000000e+00 : f32
      %105 = vector.broadcast %cst_45 : f32 to vector<48x20xf32>
      %106 = arith.addf %105, %104 : vector<48x20xf32>
      %107 = arith.divf %105, %106 : vector<48x20xf32>
      %c0_46 = arith.constant 0 : index
      %c0_47 = arith.constant 0 : index
      %108 = vector.load %arg14[%c0_46, %c0_47] : memref<48x40xf32, #tpu.memory_space<vmem>>, vector<48x20xf32>
      tpu.vector_store %arg14[%c0_46, %c0_47], %107 {strides = array<i32>} : memref<48x40xf32, #tpu.memory_space<vmem>>, vector<48x20xf32>,
      %c0_48 = arith.constant 0 : index
      %c20 = arith.constant 20 : index
      %109 = vector.load %arg14[%c0_48, %c20] : memref<48x40xf32, #tpu.memory_space<vmem>>, vector<48x20xf32>
      tpu.vector_store %arg14[%c0_48, %c20], %91 {strides = array<i32>} : memref<48x40xf32, #tpu.memory_space<vmem>>, vector<48x20xf32>,
    } else {
    }
    return
  }
  func.func @transform_0(%arg0: i32) -> i32 {
    %c0_i32 = arith.constant 0 : i32
    %c0_i32_0 = arith.constant 0 : i32
    return %c0_i32 : i32
  }
  func.func @transform_1(%arg0: i32) -> (i32, i32) {
    %c0_i32 = arith.constant 0 : i32
    %c0_i32_0 = arith.constant 0 : i32
    return %c0_i32, %arg0 : i32, i32
  }
  func.func @transform_2(%arg0: i32) -> (i32, i32) {
    %c0_i32 = arith.constant 0 : i32
    %c0_i32_0 = arith.constant 0 : i32
    return %c0_i32, %arg0 : i32, i32
  }
  func.func @transform_3(%arg0: i32) -> (i32, i32) {
    %c0_i32 = arith.constant 0 : i32
    %c0_i32_0 = arith.constant 0 : i32
    return %c0_i32, %arg0 : i32, i32
  }
  func.func @transform_4(%arg0: i32) -> (i32, i32) {
    %c0_i32 = arith.constant 0 : i32
    %c0_i32_0 = arith.constant 0 : i32
    return %c0_i32, %arg0 : i32, i32
  }
  func.func @transform_5(%arg0: i32) -> (i32, i32) {
    %c0_i32 = arith.constant 0 : i32
    %c0_i32_0 = arith.constant 0 : i32
    %c0_i32_1 = arith.constant 0 : i32
    return %c0_i32, %c0_i32_0 : i32, i32
  }
  func.func @transform_6(%arg0: i32) -> (i32, i32) {
    %c0_i32 = arith.constant 0 : i32
    %c0_i32_0 = arith.constant 0 : i32
    %c0_i32_1 = arith.constant 0 : i32
    return %c0_i32, %c0_i32_0 : i32, i32
  }
  func.func @transform_7(%arg0: i32) -> (i32, i32) {
    %c0_i32 = arith.constant 0 : i32
    %c0_i32_0 = arith.constant 0 : i32
    %c0_i32_1 = arith.constant 0 : i32
    return %c0_i32, %c0_i32_0 : i32, i32
  }
  func.func @transform_8(%arg0: i32) -> (i32, i32) {
    %c0_i32 = arith.constant 0 : i32
    %c0_i32_0 = arith.constant 0 : i32
    %c0_i32_1 = arith.constant 0 : i32
    return %c0_i32, %c0_i32_0 : i32, i32
  }
  func.func @transform_9(%arg0: i32) -> (i32, i32) {
    %c0_i32 = arith.constant 0 : i32
    %c0_i32_0 = arith.constant 0 : i32
    %c0_i32_1 = arith.constant 0 : i32
    return %c0_i32, %c0_i32_0 : i32, i32
  }
  func.func @transform_10(%arg0: i32) -> (i32, i32) {
    %c0_i32 = arith.constant 0 : i32
    %c0_i32_0 = arith.constant 0 : i32
    %c0_i32_1 = arith.constant 0 : i32
    return %c0_i32, %c0_i32_0 : i32, i32
  }
  func.func @transform_11(%arg0: i32) -> (i32, i32) {
    %c0_i32 = arith.constant 0 : i32
    %c0_i32_0 = arith.constant 0 : i32
    %c0_i32_1 = arith.constant 0 : i32
    return %c0_i32, %c0_i32_0 : i32, i32
  }
  func.func @transform_12(%arg0: i32) -> (i32, i32) {
    %c0_i32 = arith.constant 0 : i32
    %c0_i32_0 = arith.constant 0 : i32
    %c0_i32_1 = arith.constant 0 : i32
    return %c0_i32, %c0_i32_0 : i32, i32
  }
  func.func @transform_13(%arg0: i32) -> (i32, i32) {
    %c0_i32 = arith.constant 0 : i32
    %c0_i32_0 = arith.constant 0 : i32
    %c0_i32_1 = arith.constant 0 : i32
    return %c0_i32, %c0_i32_0 : i32, i32
  }
}

</mosaic_0001>

<llo_original>
// kernel: tpu_custom_call.1
$region0: #{tpu_custom_call.1}
  #allocation0 [shape = 'u32[]', space=smem, size = 0x4, offset = 0x4, fixed_abs, tag = 'smem constant byte address 0x4 - core index']
  #allocation1 [shape = 'u32[144,128]{1,0:T(1,128)}', space=vmem, size = 0x12000, scoped, tag = 'internal scratch']
  #allocation2 [shape = 'f32[48,48]{1,0:T(8,128)}', space=vmem, size = 0x6000, scoped, tag = 'scratch operand']
  %s0 = inlined_call_operand.vmem [shape: f32[2], index: 0, kind: input, shape index: {}]
  %s1 = inlined_call_operand.vmem [shape: s32[1,256], index: 1, kind: input, shape index: {}]
  %s2 = inlined_call_operand.vmem [shape: f32[1,256], index: 2, kind: input, shape index: {}]
  %s3 = inlined_call_operand.vmem [shape: f32[1,256], index: 3, kind: input, shape index: {}]
  %s4 = inlined_call_operand.vmem [shape: f32[1,256], index: 4, kind: input, shape index: {}]
  %s5 = inlined_call_operand.vmem [shape: f32[48,1], index: 5, kind: input, shape index: {}]
  %s6 = inlined_call_operand.vmem [shape: f32[32,1], index: 6, kind: input, shape index: {}]
  %s7 = inlined_call_operand.vmem [shape: f32[32,1], index: 7, kind: input, shape index: {}]
  %s8 = inlined_call_operand.vmem [shape: f32[48,32], index: 8, kind: input, shape index: {}]
  %s9 = inlined_call_operand.vmem [shape: f32[48,1], index: 9, kind: input, shape index: {}]
  %s10 = inlined_call_operand.vmem [shape: f32[1,20], index: 10, kind: input, shape index: {}]
  %s11 = inlined_call_operand.vmem [shape: f32[20,20], index: 11, kind: input, shape index: {}]
  %s12 = inlined_call_operand.vmem [shape: f32[1,20], index: 12, kind: input, shape index: {}]
  %s13 = inlined_call_operand.vmem [shape: f32[48,40], index: 13, kind: output, shape index: {}]
  %s14 = sld [smem:[#allocation0]]
  $region97: #{tpu_custom_call.1} parent=0
    _
  %s16 = ssub.s32 1, %s14
  %s17 = scalar_select 0, %s16, %s14
  $region1: #{tpu_custom_call.1} parent=0
    #allocation3 [shape = 'u8[512]{0}', space=smem, size = 0x200, scoped, tag = 'input window, operand 0, single buffered']
    #allocation4 [shape = 's32[2]{0}', space=sflag, size = 0x8, scoped, tag = 'scoped memory for tpu_custom_call.1']
    %18 = vsyncpa [#allocation4], 0
    loop: start=0, step=1, limit=4
    $region2: #{tpu_custom_call.1} parent=1 // loop_pre_header
      _
    $region3: #{tpu_custom_call.1} parent=1 // loop_header
      %s20 = sphi 0, %s24
      %p21 = scmp.ge.s32.totalorder %s20, 4
      %s28 = sphi 0, %s28
      %s30 = sphi 0, %s28
      %s31 = sphi 0, %s30
      %s45 = sphi 0, %s31
      %s51 = sphi 0, %s53
      %s54 = sphi 0, %s51
      %s55 = sphi 0, %s54
      %s71 = sphi 0, %s55
      %s77 = sphi 0, %s79
      %s80 = sphi 0, %s77
      %s81 = sphi 0, %s80
      %s97 = sphi 0, %s81
      %s103 = sphi 0, %s105
      %s106 = sphi 0, %s103
      %s107 = sphi 0, %s106
      %s123 = sphi 0, %s107
      %s129 = sphi 0, %s131
      %s132 = sphi 0, %s129
      %s133 = sphi 0, %s132
      %s149 = sphi 0, %s133
      %s153 = sphi 0, %s153
      %s155 = sphi 0, %s153
      %s156 = sphi 0, %s155
      %s170 = sphi 0, %s156
      %s174 = sphi 0, %s174
      %s176 = sphi 0, %s174
      %s177 = sphi 0, %s176
      %s191 = sphi 0, %s177
      %s195 = sphi 0, %s195
      %s197 = sphi 0, %s195
      %s198 = sphi 0, %s197
      %s212 = sphi 0, %s198
      %s216 = sphi 0, %s216
      %s218 = sphi 0, %s216
      %s219 = sphi 0, %s218
      %s233 = sphi 0, %s219
      %s237 = sphi 0, %s237
      %s239 = sphi 0, %s237
      %s240 = sphi 0, %s239
      %s254 = sphi 0, %s240
      %s258 = sphi 0, %s258
      %s260 = sphi 0, %s258
      %s261 = sphi 0, %s260
      %s275 = sphi 0, %s261
      %s279 = sphi 0, %s279
      %s281 = sphi 0, %s279
      %s282 = sphi 0, %s281
      %s296 = sphi 0, %s282
      %s300 = sphi 0, %s300
      %s302 = sphi 0, %s300
      %s303 = sphi 0, %s302
      %s317 = sphi 0, %s303
      %s321 = sphi 0, %s321
      %s323 = sphi 0, %s321
      %s324 = sphi 0, %s323
      %s338 = sphi 0, %s324
    $region4: #{tpu_custom_call.1} parent=1 // loop_header_branch
      %23 = sbr.rel (%p21) target = $region8
    $region5: #{tpu_custom_call.1} parent=1 // loop_body
      %s25 = ssub.s32 %s20, 1
      %s26 = ssub.s32 %s20, 2
      %s27 = sadd.s32 %s20, 1
      %s29 = sadd.s32 %s28, 1
      %p32 = scmp.eq.s32.totalorder %s20, 1
      %p33 = scmp.ne.s32.totalorder %s28, %s30
      %p34 = scmp.eq.s32.totalorder %s20, 0
      %p35 = por %p33, %p34
      %p36 = scmp.ne.s32.totalorder %s28, %s30
      %p37 = scmp.eq.s32.totalorder %s25, 1
      %p38 = por %p36, %p37
      %p39 = scmp.ne.s32.totalorder %s30, %s31
      %p40 = scmp.eq.s32.totalorder %s25, 0
      %p41 = por %p39, %p40
      %p42 = scmp.ne.s32.totalorder %s30, %s31
      %p43 = scmp.eq.s32.totalorder %s26, 1
      %p44 = por %p42, %p43
      %p46 = scmp.ne.s32.totalorder %s31, %s45
      %p47 = scmp.eq.s32.totalorder %s26, 0
      %p48 = por %p46, %p47
      %s49 = ssub.s32 %s20, %s27
      %p50 = scmp.eq.s32.totalorder %s49, 0
      %s52 = sadd.s32 %s51, 1
      %s53 = scalar_select %p50, %s51, %s52
      %p56 = pneg %p50
      %p57 = scmp.eq.s32.totalorder %s20, 1
      %p58 = por %p56, %p57
      %p59 = scmp.ne.s32.totalorder %s51, %s54
      %p60 = scmp.eq.s32.totalorder %s20, 0
      %p61 = por %p59, %p60
      %p62 = scmp.ne.s32.totalorder %s51, %s54
      %p63 = scmp.eq.s32.totalorder %s25, 1
      %p64 = por %p62, %p63
      %p65 = scmp.ne.s32.totalorder %s54, %s55
      %p66 = scmp.eq.s32.totalorder %s25, 0
      %p67 = por %p65, %p66
      %p68 = scmp.ne.s32.totalorder %s54, %s55
      %p69 = scmp.eq.s32.totalorder %s26, 1
      %p70 = por %p68, %p69
      %p72 = scmp.ne.s32.totalorder %s55, %s71
      %p73 = scmp.eq.s32.totalorder %s26, 0
      %p74 = por %p72, %p73
      %s75 = ssub.s32 %s20, %s27
      %p76 = scmp.eq.s32.totalorder %s75, 0
      %s78 = sadd.s32 %s77, 1
      %s79 = scalar_select %p76, %s77, %s78
      %p82 = pneg %p76
      %p83 = scmp.eq.s32.totalorder %s20, 1
      %p84 = por %p82, %p83
      %p85 = scmp.ne.s32.totalorder %s77, %s80
      %p86 = scmp.eq.s32.totalorder %s20, 0
      %p87 = por %p85, %p86
      %p88 = scmp.ne.s32.totalorder %s77, %s80
      %p89 = scmp.eq.s32.totalorder %s25, 1
      %p90 = por %p88, %p89
      %p91 = scmp.ne.s32.totalorder %s80, %s81
      %p92 = scmp.eq.s32.totalorder %s25, 0
      %p93 = por %p91, %p92
      %p94 = scmp.ne.s32.totalorder %s80, %s81
      %p95 = scmp.eq.s32.totalorder %s26, 1
      %p96 = por %p94, %p95
      %p98 = scmp.ne.s32.totalorder %s81, %s97
      %p99 = scmp.eq.s32.totalorder %s26, 0
      %p100 = por %p98, %p99
      %s101 = ssub.s32 %s20, %s27
      %p102 = scmp.eq.s32.totalorder %s101, 0
      %s104 = sadd.s32 %s103, 1
      %s105 = scalar_select %p102, %s103, %s104
      %p108 = pneg %p102
      %p109 = scmp.eq.s32.totalorder %s20, 1
      %p110 = por %p108, %p109
      %p111 = scmp.ne.s32.totalorder %s103, %s106
      %p112 = scmp.eq.s32.totalorder %s20, 0
      %p113 = por %p111, %p112
      %p114 = scmp.ne.s32.totalorder %s103, %s106
      %p115 = scmp.eq.s32.totalorder %s25, 1
      %p116 = por %p114, %p115
      %p117 = scmp.ne.s32.totalorder %s106, %s107
      %p118 = scmp.eq.s32.totalorder %s25, 0
      %p119 = por %p117, %p118
      %p120 = scmp.ne.s32.totalorder %s106, %s107
      %p121 = scmp.eq.s32.totalorder %s26, 1
      %p122 = por %p120, %p121
      %p124 = scmp.ne.s32.totalorder %s107, %s123
      %p125 = scmp.eq.s32.totalorder %s26, 0
      %p126 = por %p124, %p125
      %s127 = ssub.s32 %s20, %s27
      %p128 = scmp.eq.s32.totalorder %s127, 0
      %s130 = sadd.s32 %s129, 1
      %s131 = scalar_select %p128, %s129, %s130
      %p134 = pneg %p128
      %p135 = scmp.eq.s32.totalorder %s20, 1
      %p136 = por %p134, %p135
      %p137 = scmp.ne.s32.totalorder %s129, %s132
      %p138 = scmp.eq.s32.totalorder %s20, 0
      %p139 = por %p137, %p138
      %p140 = scmp.ne.s32.totalorder %s129, %s132
      %p141 = scmp.eq.s32.totalorder %s25, 1
      %p142 = por %p140, %p141
      %p143 = scmp.ne.s32.totalorder %s132, %s133
      %p144 = scmp.eq.s32.totalorder %s25, 0
      %p145 = por %p143, %p144
      %p146 = scmp.ne.s32.totalorder %s132, %s133
      %p147 = scmp.eq.s32.totalorder %s26, 1
      %p148 = por %p146, %p147
      %p150 = scmp.ne.s32.totalorder %s133, %s149
      %p151 = scmp.eq.s32.totalorder %s26, 0
      %p152 = por %p150, %p151
      %s154 = sadd.s32 %s153, 1
      %p157 = scmp.eq.s32.totalorder %s20, 1
      %p158 = scmp.ne.s32.totalorder %s153, %s155
      %p159 = scmp.eq.s32.totalorder %s20, 0
      %p160 = por %p158, %p159
      %p161 = scmp.ne.s32.totalorder %s153, %s155
      %p162 = scmp.eq.s32.totalorder %s25, 1
      %p163 = por %p161, %p162
      %p164 = scmp.ne.s32.totalorder %s155, %s156
      %p165 = scmp.eq.s32.totalorder %s25, 0
      %p166 = por %p164, %p165
      %p167 = scmp.ne.s32.totalorder %s155, %s156
      %p168 = scmp.eq.s32.totalorder %s26, 1
      %p169 = por %p167, %p168
      %p171 = scmp.ne.s32.totalorder %s156, %s170
      %p172 = scmp.eq.s32.totalorder %s26, 0
      %p173 = por %p171, %p172
      %s175 = sadd.s32 %s174, 1
      %p178 = scmp.eq.s32.totalorder %s20, 1
      %p179 = scmp.ne.s32.totalorder %s174, %s176
      %p180 = scmp.eq.s32.totalorder %s20, 0
      %p181 = por %p179, %p180
      %p182 = scmp.ne.s32.totalorder %s174, %s176
      %p183 = scmp.eq.s32.totalorder %s25, 1
      %p184 = por %p182, %p183
      %p185 = scmp.ne.s32.totalorder %s176, %s177
      %p186 = scmp.eq.s32.totalorder %s25, 0
      %p187 = por %p185, %p186
      %p188 = scmp.ne.s32.totalorder %s176, %s177
      %p189 = scmp.eq.s32.totalorder %s26, 1
      %p190 = por %p188, %p189
      %p192 = scmp.ne.s32.totalorder %s177, %s191
      %p193 = scmp.eq.s32.totalorder %s26, 0
      %p194 = por %p192, %p193
      %s196 = sadd.s32 %s195, 1
      %p199 = scmp.eq.s32.totalorder %s20, 1
      %p200 = scmp.ne.s32.totalorder %s195, %s197
      %p201 = scmp.eq.s32.totalorder %s20, 0
      %p202 = por %p200, %p201
      %p203 = scmp.ne.s32.totalorder %s195, %s197
      %p204 = scmp.eq.s32.totalorder %s25, 1
      %p205 = por %p203, %p204
      %p206 = scmp.ne.s32.totalorder %s197, %s198
      %p207 = scmp.eq.s32.totalorder %s25, 0
      %p208 = por %p206, %p207
      %p209 = scmp.ne.s32.totalorder %s197, %s198
      %p210 = scmp.eq.s32.totalorder %s26, 1
      %p211 = por %p209, %p210
      %p213 = scmp.ne.s32.totalorder %s198, %s212
      %p214 = scmp.eq.s32.totalorder %s26, 0
      %p215 = por %p213, %p214
      %s217 = sadd.s32 %s216, 1
      %p220 = scmp.eq.s32.totalorder %s20, 1
      %p221 = scmp.ne.s32.totalorder %s216, %s218
      %p222 = scmp.eq.s32.totalorder %s20, 0
      %p223 = por %p221, %p222
      %p224 = scmp.ne.s32.totalorder %s216, %s218
      %p225 = scmp.eq.s32.totalorder %s25, 1
      %p226 = por %p224, %p225
      %p227 = scmp.ne.s32.totalorder %s218, %s219
      %p228 = scmp.eq.s32.totalorder %s25, 0
      %p229 = por %p227, %p228
      %p230 = scmp.ne.s32.totalorder %s218, %s219
      %p231 = scmp.eq.s32.totalorder %s26, 1
      %p232 = por %p230, %p231
      %p234 = scmp.ne.s32.totalorder %s219, %s233
      %p235 = scmp.eq.s32.totalorder %s26, 0
      %p236 = por %p234, %p235
      %s238 = sadd.s32 %s237, 1
      %p241 = scmp.eq.s32.totalorder %s20, 1
      %p242 = scmp.ne.s32.totalorder %s237, %s239
      %p243 = scmp.eq.s32.totalorder %s20, 0
      %p244 = por %p242, %p243
      %p245 = scmp.ne.s32.totalorder %s237, %s239
      %p246 = scmp.eq.s32.totalorder %s25, 1
      %p247 = por %p245, %p246
      %p248 = scmp.ne.s32.totalorder %s239, %s240
      %p249 = scmp.eq.s32.totalorder %s25, 0
      %p250 = por %p248, %p249
      %p251 = scmp.ne.s32.totalorder %s239, %s240
      %p252 = scmp.eq.s32.totalorder %s26, 1
      %p253 = por %p251, %p252
      %p255 = scmp.ne.s32.totalorder %s240, %s254
      %p256 = scmp.eq.s32.totalorder %s26, 0
      %p257 = por %p255, %p256
      %s259 = sadd.s32 %s258, 1
      %p262 = scmp.eq.s32.totalorder %s20, 1
      %p263 = scmp.ne.s32.totalorder %s258, %s260
      %p264 = scmp.eq.s32.totalorder %s20, 0
      %p265 = por %p263, %p264
      %p266 = scmp.ne.s32.totalorder %s258, %s260
      %p267 = scmp.eq.s32.totalorder %s25, 1
      %p268 = por %p266, %p267
      %p269 = scmp.ne.s32.totalorder %s260, %s261
      %p270 = scmp.eq.s32.totalorder %s25, 0
      %p271 = por %p269, %p270
      %p272 = scmp.ne.s32.totalorder %s260, %s261
      %p273 = scmp.eq.s32.totalorder %s26, 1
      %p274 = por %p272, %p273
      %p276 = scmp.ne.s32.totalorder %s261, %s275
      %p277 = scmp.eq.s32.totalorder %s26, 0
      %p278 = por %p276, %p277
      %s280 = sadd.s32 %s279, 1
      %p283 = scmp.eq.s32.totalorder %s20, 1
      %p284 = scmp.ne.s32.totalorder %s279, %s281
      %p285 = scmp.eq.s32.totalorder %s20, 0
      %p286 = por %p284, %p285
      %p287 = scmp.ne.s32.totalorder %s279, %s281
      %p288 = scmp.eq.s32.totalorder %s25, 1
      %p289 = por %p287, %p288
      %p290 = scmp.ne.s32.totalorder %s281, %s282
      %p291 = scmp.eq.s32.totalorder %s25, 0
      %p292 = por %p290, %p291
      %p293 = scmp.ne.s32.totalorder %s281, %s282
      %p294 = scmp.eq.s32.totalorder %s26, 1
      %p295 = por %p293, %p294
      %p297 = scmp.ne.s32.totalorder %s282, %s296
      %p298 = scmp.eq.s32.totalorder %s26, 0
      %p299 = por %p297, %p298
      %s301 = sadd.s32 %s300, 1
      %p304 = scmp.eq.s32.totalorder %s20, 1
      %p305 = scmp.ne.s32.totalorder %s300, %s302
      %p306 = scmp.eq.s32.totalorder %s20, 0
      %p307 = por %p305, %p306
      %p308 = scmp.ne.s32.totalorder %s300, %s302
      %p309 = scmp.eq.s32.totalorder %s25, 1
      %p310 = por %p308, %p309
      %p311 = scmp.ne.s32.totalorder %s302, %s303
      %p312 = scmp.eq.s32.totalorder %s25, 0
      %p313 = por %p311, %p312
      %p314 = scmp.ne.s32.totalorder %s302, %s303
      %p315 = scmp.eq.s32.totalorder %s26, 1
      %p316 = por %p314, %p315
      %p318 = scmp.ne.s32.totalorder %s303, %s317
      %p319 = scmp.eq.s32.totalorder %s26, 0
      %p320 = por %p318, %p319
      %s322 = sadd.s32 %s321, 1
      %p325 = scmp.eq.s32.totalorder %s20, 1
      %p326 = scmp.ne.s32.totalorder %s321, %s323
      %p327 = scmp.eq.s32.totalorder %s20, 0
      %p328 = por %p326, %p327
      %p329 = scmp.ne.s32.totalorder %s321, %s323
      %p330 = scmp.eq.s32.totalorder %s25, 1
      %p331 = por %p329, %p330
      %p332 = scmp.ne.s32.totalorder %s323, %s324
      %p333 = scmp.eq.s32.totalorder %s25, 0
      %p334 = por %p332, %p333
      %p335 = scmp.ne.s32.totalorder %s323, %s324
      %p336 = scmp.eq.s32.totalorder %s26, 1
      %p337 = por %p335, %p336
      %p339 = scmp.ne.s32.totalorder %s324, %s338
      %p340 = scmp.eq.s32.totalorder %s26, 0
      %p341 = por %p339, %p340
      %p342 = scmp.le.s32.totalorder 1, %s20
      %p343 = scmp.lt.s32.totalorder %s20, 3
      %p344 = pnand %p342, %p343
      %p345 = pneg %p344
      // Predicated region
      $region9: #{tpu_custom_call.1} parent=5 // pred_check
        _
      $region10: #{tpu_custom_call.1} parent=5 // pred_check_branch
        %347 = sbr.rel (%p344) target = $region12
      $region11: #{tpu_custom_call.1} parent=5 // pred_region
        %s348 = ssub.s32 %s20, 1
        // Predicated region
        $region13: #{tpu_custom_call.1} parent=11 // pred_check
          %p349 = pneg %p41
        $region14: #{tpu_custom_call.1} parent=11 // pred_check_branch
          %351 = sbr.rel (%p349) target = $region16
        $region15: #{tpu_custom_call.1} parent=11 // pred_region
          %s353 = ssub.s32 16, 16
          %354 = vsyncadd [#allocation4], %s353
          %s356 = sshll.u32 %s0, 4
          %s357 = int_to_ptr.vmem [resolvable:$true] %s356
          %359 = dma.vmem_to_smem %s357, 16, [#allocation3], [#allocation4]
        $region16: #{tpu_custom_call.1} parent=11 // pred_fallthru
          _
        // Predicated region
        $region17: #{tpu_custom_call.1} parent=11 // pred_check
          %p360 = pneg %p166
        $region18: #{tpu_custom_call.1} parent=11 // pred_check_branch
          %362 = sbr.rel (%p360) target = $region20
        $region19: #{tpu_custom_call.1} parent=11 // pred_region
          _
        $region20: #{tpu_custom_call.1} parent=11 // pred_fallthru
          _
        // Predicated region
        $region21: #{tpu_custom_call.1} parent=11 // pred_check
          %p363 = pneg %p187
        $region22: #{tpu_custom_call.1} parent=11 // pred_check_branch
          %365 = sbr.rel (%p363) target = $region24
        $region23: #{tpu_custom_call.1} parent=11 // pred_region
          _
        $region24: #{tpu_custom_call.1} parent=11 // pred_fallthru
          _
        // Predicated region
        $region25: #{tpu_custom_call.1} parent=11 // pred_check
          %p366 = pneg %p208
        $region26: #{tpu_custom_call.1} parent=11 // pred_check_branch
          %368 = sbr.rel (%p366) target = $region28
        $region27: #{tpu_custom_call.1} parent=11 // pred_region
          _
        $region28: #{tpu_custom_call.1} parent=11 // pred_fallthru
          _
        // Predicated region
        $region29: #{tpu_custom_call.1} parent=11 // pred_check
          %p369 = pneg %p229
        $region30: #{tpu_custom_call.1} parent=11 // pred_check_branch
          %371 = sbr.rel (%p369) target = $region32
        $region31: #{tpu_custom_call.1} parent=11 // pred_region
          _
        $region32: #{tpu_custom_call.1} parent=11 // pred_fallthru
          _
        // Predicated region
        $region33: #{tpu_custom_call.1} parent=11 // pred_check
          %p372 = pneg %p250
        $region34: #{tpu_custom_call.1} parent=11 // pred_check_branch
          %374 = sbr.rel (%p372) target = $region36
        $region35: #{tpu_custom_call.1} parent=11 // pred_region
          _
        $region36: #{tpu_custom_call.1} parent=11 // pred_fallthru
          _
        // Predicated region
        $region37: #{tpu_custom_call.1} parent=11 // pred_check
          %p375 = pneg %p271
        $region38: #{tpu_custom_call.1} parent=11 // pred_check_branch
          %377 = sbr.rel (%p375) target = $region40
        $region39: #{tpu_custom_call.1} parent=11 // pred_region
          _
        $region40: #{tpu_custom_call.1} parent=11 // pred_fallthru
          _
        // Predicated region
        $region41: #{tpu_custom_call.1} parent=11 // pred_check
          %p378 = pneg %p292
        $region42: #{tpu_custom_call.1} parent=11 // pred_check_branch
          %380 = sbr.rel (%p378) target = $region44
        $region43: #{tpu_custom_call.1} parent=11 // pred_region
          _
        $region44: #{tpu_custom_call.1} parent=11 // pred_fallthru
          _
        // Predicated region
        $region45: #{tpu_custom_call.1} parent=11 // pred_check
          %p381 = pneg %p313
        $region46: #{tpu_custom_call.1} parent=11 // pred_check_branch
          %383 = sbr.rel (%p381) target = $region48
        $region47: #{tpu_custom_call.1} parent=11 // pred_region
          _
        $region48: #{tpu_custom_call.1} parent=11 // pred_fallthru
          _
      $region12: #{tpu_custom_call.1} parent=5 // pred_fallthru
        _
      %p384 = scmp.lt.s32.totalorder %s20, 2
      // Predicated region
      $region49: #{tpu_custom_call.1} parent=5 // pred_check
        %p385 = pneg %p384
      $region50: #{tpu_custom_call.1} parent=5 // pred_check_branch
        %387 = sbr.rel (%p385) target = $region52
      $region51: #{tpu_custom_call.1} parent=5 // pred_region
        // Predicated region
        $region53: #{tpu_custom_call.1} parent=51 // pred_check
          %p388 = pneg %p61
        $region54: #{tpu_custom_call.1} parent=51 // pred_check_branch
          %390 = sbr.rel (%p388) target = $region56
        $region55: #{tpu_custom_call.1} parent=51 // pred_region
          %p391 = scmp.lt.s32.totalorder %s20, 1
          %s392 = scalar_select %p391, %s20, 1
          %s393 = scalar_lea.vmem %s1, %s392
        $region56: #{tpu_custom_call.1} parent=51 // pred_fallthru
          _
        // Predicated region
        $region57: #{tpu_custom_call.1} parent=51 // pred_check
          %p394 = pneg %p87
        $region58: #{tpu_custom_call.1} parent=51 // pred_check_branch
          %396 = sbr.rel (%p394) target = $region60
        $region59: #{tpu_custom_call.1} parent=51 // pred_region
          %p397 = scmp.lt.s32.totalorder %s20, 1
          %s398 = scalar_select %p397, %s20, 1
          %s399 = scalar_lea.vmem %s2, %s398
        $region60: #{tpu_custom_call.1} parent=51 // pred_fallthru
          _
        // Predicated region
        $region61: #{tpu_custom_call.1} parent=51 // pred_check
          %p400 = pneg %p113
        $region62: #{tpu_custom_call.1} parent=51 // pred_check_branch
          %402 = sbr.rel (%p400) target = $region64
        $region63: #{tpu_custom_call.1} parent=51 // pred_region
          %p403 = scmp.lt.s32.totalorder %s20, 1
          %s404 = scalar_select %p403, %s20, 1
          %s405 = scalar_lea.vmem %s3, %s404
        $region64: #{tpu_custom_call.1} parent=51 // pred_fallthru
          _
        // Predicated region
        $region65: #{tpu_custom_call.1} parent=51 // pred_check
          %p406 = pneg %p139
        $region66: #{tpu_custom_call.1} parent=51 // pred_check_branch
          %408 = sbr.rel (%p406) target = $region68
        $region67: #{tpu_custom_call.1} parent=51 // pred_region
          %p409 = scmp.lt.s32.totalorder %s20, 1
          %s410 = scalar_select %p409, %s20, 1
          %s411 = scalar_lea.vmem %s4, %s410
        $region68: #{tpu_custom_call.1} parent=51 // pred_fallthru
          _
      $region52: #{tpu_custom_call.1} parent=5 // pred_fallthru
        _
      %p412 = scmp.le.s32.totalorder 1, %s20
      %p413 = scmp.lt.s32.totalorder %s20, 3
      %p414 = pnand %p412, %p413
      %p415 = pneg %p414
      // Predicated region
      $region69: #{tpu_custom_call.1} parent=5 // pred_check
        _
      $region70: #{tpu_custom_call.1} parent=5 // pred_check_branch
        %417 = sbr.rel (%p414) target = $region72
      $region71: #{tpu_custom_call.1} parent=5 // pred_region
        %s418 = ssub.s32 %s20, 1
        // Predicated region
        $region73: #{tpu_custom_call.1} parent=71 // pred_check
          %p419 = pneg %p41
        $region74: #{tpu_custom_call.1} parent=71 // pred_check_branch
          %421 = sbr.rel (%p419) target = $region76
        $region75: #{tpu_custom_call.1} parent=71 // pred_region
          %422 = dma.done [#allocation4], 16
        $region76: #{tpu_custom_call.1} parent=71 // pred_fallthru
          _
        %423 = sfence
        %p424 = pneg %p41
        %p425 = pneg %p38
        %p426 = scmp.lt.s32.totalorder %s25, 1
        %s427 = scalar_select %p426, %s25, 1
        %s428 = scalar_lea.vmem %s1, %s427
        %p429 = pneg %p67
        %p430 = pneg %p64
        %p431 = scmp.lt.s32.totalorder %s25, 1
        %s432 = scalar_select %p431, %s25, 1
        %s433 = scalar_lea.vmem %s2, %s432
        %p434 = pneg %p93
        %p435 = pneg %p90
        %p436 = scmp.lt.s32.totalorder %s25, 1
        %s437 = scalar_select %p436, %s25, 1
        %s438 = scalar_lea.vmem %s3, %s437
        %p439 = pneg %p119
        %p440 = pneg %p116
        %p441 = scmp.lt.s32.totalorder %s25, 1
        %s442 = scalar_select %p441, %s25, 1
        %s443 = scalar_lea.vmem %s4, %s442
        %p444 = pneg %p145
        %p445 = pneg %p142
        %p446 = pneg %p166
        %p447 = pneg %p163
        %p448 = pneg %p187
        %p449 = pneg %p184
        %p450 = pneg %p208
        %p451 = pneg %p205
        %p452 = pneg %p229
        %p453 = pneg %p226
        %p454 = pneg %p250
        %p455 = pneg %p247
        %p456 = pneg %p271
        %p457 = pneg %p268
        %p458 = pneg %p292
        %p459 = pneg %p289
        %p460 = pneg %p313
        %p461 = pneg %p310
        %p462 = pneg %p334
        %p463 = pneg %p331
        %p464 = scmp.lt.s32.totalorder %s25, 1
        %s465 = scalar_select %p464, %s25, 1
        %s466 = scalar_lea.vmem %s1, %s465
        %p467 = scmp.lt.s32.totalorder %s25, 1
        %s468 = scalar_select %p467, %s25, 1
        %s469 = scalar_lea.vmem %s2, %s468
        %p470 = scmp.lt.s32.totalorder %s25, 1
        %s471 = scalar_select %p470, %s25, 1
        %s472 = scalar_lea.vmem %s3, %s471
        %p473 = scmp.lt.s32.totalorder %s25, 1
        %s474 = scalar_select %p473, %s25, 1
        %s475 = scalar_lea.vmem %s4, %s474
        %p476 = scmp.eq.s32.totalorder %s25, 0
        // Predicated region
        $region77: #{tpu_custom_call.1} parent=71 // pred_check
          %p477 = pneg %p476
        $region78: #{tpu_custom_call.1} parent=71 // pred_check_branch
          %479 = sbr.rel (%p477) target = $region80
        $region79: #{tpu_custom_call.1} parent=71 // pred_region
          %vm480 = vcmask 392192
          %481 = vst.msk [vmem:[#allocation2] sm:$0xff] %vm480, 0.0
          %482 = vst.msk [vmem:[#allocation2 + $0x8] sm:$0xff] %vm480, 0.0
          %483 = vst.msk [vmem:[#allocation2 + $0x10] sm:$0xff] %vm480, 0.0
          %484 = vst.msk [vmem:[#allocation2 + $0x18] sm:$0xff] %vm480, 0.0
          %485 = vst.msk [vmem:[#allocation2 + $0x20] sm:$0xff] %vm480, 0.0
          %486 = vst.msk [vmem:[#allocation2 + $0x28] sm:$0xff] %vm480, 0.0
        $region80: #{tpu_custom_call.1} parent=71 // pred_fallthru
          _
        %v487 = vld [vmem:[%s469] sm:$0x1]
        %v488 = vld [vmem:[%s6] sm:$0xff]
        %v489 = vld [vmem:[%s6 + $0x8] sm:$0xff]
        %v490 = vld [vmem:[%s6 + $0x10] sm:$0xff]
        %v491 = vld [vmem:[%s6 + $0x18] sm:$0xff]
        %493 = vset.pattern.permute.xlu0 0
        %494 = vperm.xlu0 %493, %v488
        %v495 = vpop.permute.xlu0 %494
        %498 = vset.pattern.permute.xlu0 0
        %499 = vperm.xlu0 %498, %v489
        %v500 = vpop.permute.xlu0 %499
        %503 = vset.pattern.permute.xlu0 0
        %504 = vperm.xlu0 %503, %v490
        %v505 = vpop.permute.xlu0 %504
        %508 = vset.pattern.permute.xlu0 0
        %509 = vperm.xlu0 %508, %v491
        %v510 = vpop.permute.xlu0 %509
        %v513 = vlaneseq
        %v514 = vshrl.u32 %v513, 7
        %v515 = vsub.s32 0, %v514
        %v516 = vrot.slane %v487, %v515
        %v518 = vmul.f32 %v495, %v516
        %v519 = vmul.f32 %v500, %v516
        %v520 = vmul.f32 %v505, %v516
        %v521 = vmul.f32 %v510, %v516
        %v522 = vld [vmem:[%s7] sm:$0xff]
        %v523 = vld [vmem:[%s7 + $0x8] sm:$0xff]
        %v524 = vld [vmem:[%s7 + $0x10] sm:$0xff]
        %v525 = vld [vmem:[%s7 + $0x18] sm:$0xff]
        %527 = vset.pattern.permute.xlu0 0
        %528 = vperm.xlu0 %527, %v522
        %v529 = vpop.permute.xlu0 %528
        %532 = vset.pattern.permute.xlu0 0
        %533 = vperm.xlu0 %532, %v523
        %v534 = vpop.permute.xlu0 %533
        %537 = vset.pattern.permute.xlu0 0
        %538 = vperm.xlu0 %537, %v524
        %v539 = vpop.permute.xlu0 %538
        %542 = vset.pattern.permute.xlu0 0
        %543 = vperm.xlu0 %542, %v525
        %v544 = vpop.permute.xlu0 %543
        %v546 = vadd.f32 %v518, %v529
        %v547 = vadd.f32 %v519, %v534
        %v548 = vadd.f32 %v520, %v539
        %v549 = vadd.f32 %v521, %v544
        %v550 = vmax.f32 %v546, 0.0
        %v551 = vmax.f32 %v547, 0.0
        %v552 = vmax.f32 %v548, 0.0
        %v553 = vmax.f32 %v549, 0.0
        %v554 = vld [vmem:[%s8] sm:$0xff]
        %v555 = vld [vmem:[%s8 + $0x8] sm:$0xff]
        %v556 = vld [vmem:[%s8 + $0x10] sm:$0xff]
        %v557 = vld [vmem:[%s8 + $0x18] sm:$0xff]
        %v558 = vld [vmem:[%s8 + $0x20] sm:$0xff]
        %v559 = vld [vmem:[%s8 + $0x28] sm:$0xff]
        %v560 = vld [vmem:[%s9] sm:$0xff]
        %v561 = vld [vmem:[%s9 + $0x8] sm:$0xff]
        %v562 = vld [vmem:[%s9 + $0x10] sm:$0xff]
        %v563 = vld [vmem:[%s9 + $0x18] sm:$0xff]
        %v564 = vld [vmem:[%s9 + $0x20] sm:$0xff]
        %v565 = vld [vmem:[%s9 + $0x28] sm:$0xff]
        %567 = vset.pattern.permute.xlu0 0
        %568 = vperm.xlu0 %567, %v560
        %v569 = vpop.permute.xlu0 %568
        %572 = vset.pattern.permute.xlu0 0
        %573 = vperm.xlu0 %572, %v561
        %v574 = vpop.permute.xlu0 %573
        %577 = vset.pattern.permute.xlu0 0
        %578 = vperm.xlu0 %577, %v562
        %v579 = vpop.permute.xlu0 %578
        %582 = vset.pattern.permute.xlu0 0
        %583 = vperm.xlu0 %582, %v563
        %v584 = vpop.permute.xlu0 %583
        %587 = vset.pattern.permute.xlu0 0
        %588 = vperm.xlu0 %587, %v564
        %v589 = vpop.permute.xlu0 %588
        %592 = vset.pattern.permute.xlu0 0
        %593 = vperm.xlu0 %592, %v565
        %v594 = vpop.permute.xlu0 %593
        %vm596 = vcmask 261120
        %v598 = vsel %vm596, %v554, 0
        %v601 = vsel %vm596, %v555, 0
        %v604 = vsel %vm596, %v556, 0
        %v607 = vsel %vm596, %v557, 0
        %v610 = vsel %vm596, %v558, 0
        %v613 = vsel %vm596, %v559, 0
        %615 = vmatprep.subr.mxu0 0.0
        %616 = vmatpush1.msra.mxu0 %v550
        %617 = vmatprep.subr.mxu0 0.0
        %618 = vmatpush1.msra.mxu0 %v551
        %619 = vmatprep.subr.mxu0 0.0
        %620 = vmatpush1.msra.mxu0 %v552
        %621 = vmatprep.subr.mxu0 0.0
        %622 = vmatpush1.msra.mxu0 %v553
        %623 = vmatprep.subr.mxu0 0.0
        %624 = vmatpush1.msra.mxu0 0.0
        %625 = vmatprep.subr.mxu0 0.0
        %626 = vmatpush1.msra.mxu0 0.0
        %627 = vmatprep.subr.mxu0 0.0
        %628 = vmatpush1.msra.mxu0 0.0
        %629 = vmatprep.subr.mxu0 0.0
        %630 = vmatpush1.msra.mxu0 0.0
        %631 = vmatprep.subr.mxu0 0.0
        %632 = vmatpush1.msra.mxu0 0.0
        %633 = vmatprep.subr.mxu0 0.0
        %634 = vmatpush1.msra.mxu0 0.0
        %635 = vmatprep.subr.mxu0 0.0
        %636 = vmatpush1.msra.mxu0 0.0
        %637 = vmatprep.subr.mxu0 0.0
        %638 = vmatpush1.msra.mxu0 0.0
        %639 = vmatprep.subr.mxu0 0.0
        %640 = vmatpush1.msra.mxu0 0.0
        %641 = vmatprep.subr.mxu0 0.0
        %642 = vmatpush1.msra.mxu0 0.0
        %643 = vmatprep.subr.mxu0 0.0
        %644 = vmatpush1.msra.mxu0 0.0
        %645 = vmatprep.subr.mxu0 0.0
        %646 = vmatpush1.msra.mxu0 0.0
        %647 = vmatprep.subr.mxu0 0.0
        %648 = vmatpush1.msra.mxu0 0.0
        %649 = vmatprep.subr.mxu0 0.0
        %650 = vmatpush1.msra.mxu0 0.0
        %651 = vmatprep.subr.mxu0 0.0
        %652 = vmatpush1.msra.mxu0 0.0
        %653 = vmatprep.subr.mxu0 0.0
        %654 = vmatpush1.msra.mxu0 0.0
        %655 = vmatprep.subr.mxu0 0.0
        %656 = vmatpush1.msra.mxu0 0.0
        %657 = vmatprep.subr.mxu0 0.0
        %658 = vmatpush1.msra.mxu0 0.0
        %659 = vmatprep.subr.mxu0 0.0
        %660 = vmatpush1.msra.mxu0 0.0
        %661 = vmatprep.subr.mxu0 0.0
        %662 = vmatpush1.msra.mxu0 0.0
        %663 = vmatprep.subr.mxu0 0.0
        %664 = vmatpush1.msra.mxu0 0.0
        %665 = vmatprep.subr.mxu0 0.0
        %666 = vmatpush1.msra.mxu0 0.0
        %667 = vmatprep.subr.mxu0 0.0
        %668 = vmatpush1.msra.mxu0 0.0
        %669 = vmatprep.subr.mxu0 0.0
        %670 = vmatpush1.msra.mxu0 0.0
        %671 = vmatprep.subr.mxu0 0.0
        %672 = vmatpush1.msra.mxu0 0.0
        %673 = vmatprep.subr.mxu0 0.0
        %674 = vmatpush1.msra.mxu0 0.0
        %675 = vmatprep.subr.mxu0 0.0
        %676 = vmatpush1.msra.mxu0 0.0
        %677 = vmatprep.subr.mxu0 0.0
        %678 = vmatpush1.msra.mxu0 0.0
        %679 = vmatprep.mubr.f32.mxu0 0.0
        %680 = vmatmul.mubr.f32.gmra.mrb[0].mxu0 %v598
        %v681 = vpop.f32.mrb[0].mxu0
        %v682 = vadd.f32 %v569, %v681
        %v683 = vpop.f32.mrb[0].mxu0
        %684 = vmatprep.mubr.f32.mxu0 0.0
        %685 = vmatmul.mubr.f32.gmra.mrb[0].mxu0 %v601
        %v686 = vpop.f32.mrb[0].mxu0
        %v687 = vadd.f32 %v574, %v686
        %v688 = vpop.f32.mrb[0].mxu0
        %689 = vmatprep.mubr.f32.mxu0 0.0
        %690 = vmatmul.mubr.f32.gmra.mrb[0].mxu0 %v604
        %v691 = vpop.f32.mrb[0].mxu0
        %v692 = vadd.f32 %v579, %v691
        %v693 = vpop.f32.mrb[0].mxu0
        %694 = vmatprep.mubr.f32.mxu0 0.0
        %695 = vmatmul.mubr.f32.gmra.mrb[0].mxu0 %v607
        %v696 = vpop.f32.mrb[0].mxu0
        %v697 = vadd.f32 %v584, %v696
        %v698 = vpop.f32.mrb[0].mxu0
        %699 = vmatprep.mubr.f32.mxu0 0.0
        %700 = vmatmul.mubr.f32.gmra.mrb[0].mxu0 %v610
        %v701 = vpop.f32.mrb[0].mxu0
        %v702 = vadd.f32 %v589, %v701
        %v703 = vpop.f32.mrb[0].mxu0
        %704 = vmatprep.mubr.f32.mxu0 0.0
        %705 = vmatmul.mubr.f32.gmra.mrb[0].mxu0 %v613
        %v706 = vpop.f32.mrb[0].mxu0
        %v707 = vadd.f32 %v594, %v706
        %v708 = vpop.f32.mrb[0].mxu0
        %709 = vdwg.mxu0
        %v710 = vrcp.pop 0.5
        %v711 = vmul.f32 %v487, %v710
        %v712 = vcvt.f32.s32.to.zero.pseudo %v711
        %vm713 = vcmp.lt.s32.totalorder %v712, 9
        %v714 = vsel %vm713, %v712, 9
        %v715 = vlaneseq
        %v716 = vshrl.u32 %v715, 7
        %v717 = vadd.s32 %v716, 8
        %v718 = vadd.s32 %v716, 16
        %v719 = vadd.s32 %v716, 24
        %v720 = vadd.s32 %v716, 32
        %v721 = vadd.s32 %v716, 40
        %v722 = vlaneseq
        %v723 = vshrl.u32 %v722, 7
        %v724 = vsub.s32 0, %v723
        %v725 = vrot.slane %v714, %v724
        %vm726 = vcmp.eq.s32.totalorder %v716, %v725
        %vm727 = vcmp.eq.s32.totalorder %v717, %v725
        %vm728 = vcmp.eq.s32.totalorder %v718, %v725
        %vm729 = vcmp.eq.s32.totalorder %v719, %v725
        %vm730 = vcmp.eq.s32.totalorder %v720, %v725
        %vm731 = vcmp.eq.s32.totalorder %v721, %v725
        %v732 = vadd.s32 %v714, 20
        %v733 = vlaneseq
        %v734 = vshrl.u32 %v733, 7
        %v735 = vsub.s32 0, %v734
        %v736 = vrot.slane %v732, %v735
        %vm737 = vcmp.eq.s32.totalorder %v716, %v736
        %vm738 = vcmp.eq.s32.totalorder %v717, %v736
        %vm739 = vcmp.eq.s32.totalorder %v718, %v736
        %vm740 = vcmp.eq.s32.totalorder %v719, %v736
        %vm741 = vcmp.eq.s32.totalorder %v720, %v736
        %vm742 = vcmp.eq.s32.totalorder %v721, %v736
        %vm743 = vmor %vm726, %vm737
        %vm744 = vmor %vm727, %vm738
        %vm745 = vmor %vm728, %vm739
        %vm746 = vmor %vm729, %vm740
        %vm747 = vmor %vm730, %vm741
        %vm748 = vmor %vm731, %vm742
        %vm749 = vcmp.eq.s32.totalorder %v716, 40
        %vm750 = vcmp.eq.s32.totalorder %v717, 40
        %vm751 = vcmp.eq.s32.totalorder %v718, 40
        %vm752 = vcmp.eq.s32.totalorder %v719, 40
        %vm753 = vcmp.eq.s32.totalorder %v720, 40
        %vm754 = vcmp.eq.s32.totalorder %v721, 40
        %vm755 = vmor %vm743, %vm749
        %vm756 = vmor %vm744, %vm750
        %vm757 = vmor %vm745, %vm751
        %vm758 = vmor %vm746, %vm752
        %vm759 = vmor %vm747, %vm753
        %vm760 = vmor %vm748, %vm754
        %v761 = vsel %vm755, 1, 0
        %v762 = vsel %vm756, 1, 0
        %v763 = vsel %vm757, 1, 0
        %v764 = vsel %vm758, 1, 0
        %v765 = vsel %vm759, 1, 0
        %v766 = vsel %vm760, 1, 0
        %v767 = vcvt.s32.f32 %v761
        %v768 = vcvt.s32.f32 %v762
        %v769 = vcvt.s32.f32 %v763
        %v770 = vcvt.s32.f32 %v764
        %v771 = vcvt.s32.f32 %v765
        %v772 = vcvt.s32.f32 %v766
        %v773 = vadd.f32 %v682, %v767
        %v774 = vadd.f32 %v687, %v768
        %v775 = vadd.f32 %v692, %v769
        %v776 = vadd.f32 %v697, %v770
        %v777 = vadd.f32 %v702, %v771
        %v778 = vadd.f32 %v707, %v772
        %s779 = sld [smem:[#allocation3]]
        %s780 = sld [smem:[#allocation3 + $0x1]]
        %v781 = vld [vmem:[%s472] sm:$0x1]
        %v782 = vstv %s779
        %v783 = vmul.f32 %v782, %v781
        %s784 = ssub.f32 1.0, %s779
        %v785 = vld [vmem:[%s475] sm:$0x1]
        %v786 = vstv %s784
        %v787 = vmul.f32 %v786, %v785
        %v788 = vsub.f32 %v783, %v787
        %v789 = vand.u32 2147483647, %v788
        %vm790 = vcmp.gt.f32.partialorder %v789, 0.0
        %v791 = vsel %vm790, %v789, 1.0
        %v792 = vlog2.pop %v791
        %v793 = vmul.f32 %v792, 0.6931472
        %v794 = vstv %s780
        %v795 = vmul.f32 %v794, %v793
        %v796 = vmul.f32 %v795, 1.442695
        %v797 = vpow.pop %v796
        %v798 = vsel %vm790, %v797, 0.0
        %vm799 = vcmp.ge.s32.totalorder %v716, 20
        %vm800 = vcmp.ge.s32.totalorder %v717, 20
        %vm801 = vcmp.ge.s32.totalorder %v718, 20
        %vm802 = vcmp.ge.s32.totalorder %v719, 20
        %vm803 = vcmp.ge.s32.totalorder %v720, 20
        %vm804 = vcmp.ge.s32.totalorder %v721, 20
        %v806 = vlaneseq
        %v807 = vshrl.u32 %v806, 7
        %v808 = vsub.s32 0, %v807
        %v809 = vrot.slane %v798, %v808
        %v811 = vsel %vm799, %v809, 1.0
        %v812 = vsel %vm800, %v809, 1.0
        %v813 = vsel %vm801, %v809, 1.0
        %v814 = vsel %vm802, %v809, 1.0
        %v815 = vsel %vm803, %v809, 1.0
        %v816 = vsel %vm804, %v809, 1.0
        %v817 = vmul.f32 %v773, %v811
        %v818 = vmul.f32 %v774, %v812
        %v819 = vmul.f32 %v775, %v813
        %v820 = vmul.f32 %v776, %v814
        %v821 = vmul.f32 %v777, %v815
        %v822 = vmul.f32 %v778, %v816
        %v823 = vld [vmem:[%s466] sm:$0x1]
        %v824 = vlaneseq
        %v825 = vshrl.u32 %v824, 7
        %v826 = vsub.s32 0, %v825
        %v827 = vrot.slane %v823, %v826
        %vm828 = vcmp.eq.s32.totalorder %v716, %v827
        %vm829 = vcmp.eq.s32.totalorder %v717, %v827
        %vm830 = vcmp.eq.s32.totalorder %v718, %v827
        %vm831 = vcmp.eq.s32.totalorder %v719, %v827
        %vm832 = vcmp.eq.s32.totalorder %v720, %v827
        %vm833 = vcmp.eq.s32.totalorder %v721, %v827
        %v834 = vsel %vm828, 1, 0
        %v835 = vsel %vm829, 1, 0
        %v836 = vsel %vm830, 1, 0
        %v837 = vsel %vm831, 1, 0
        %v838 = vsel %vm832, 1, 0
        %v839 = vsel %vm833, 1, 0
        %v840 = vcvt.s32.f32 %v834
        %v841 = vcvt.s32.f32 %v835
        %v842 = vcvt.s32.f32 %v836
        %v843 = vcvt.s32.f32 %v837
        %v844 = vcvt.s32.f32 %v838
        %v845 = vcvt.s32.f32 %v839
        %v846 = vld [vmem:[#allocation2] sm:$0xff]
        %v847 = vld [vmem:[#allocation2 + $0x8] sm:$0xff]
        %v848 = vld [vmem:[#allocation2 + $0x10] sm:$0xff]
        %v849 = vld [vmem:[#allocation2 + $0x18] sm:$0xff]
        %v850 = vld [vmem:[#allocation2 + $0x20] sm:$0xff]
        %v851 = vld [vmem:[#allocation2 + $0x28] sm:$0xff]
        %852 = vmatprep.subr.mxu0 0.0
        %853 = vmatpush1.xpose.msra.mxu0 %v817
        %854 = vmatprep.subr.mxu0 0.0
        %855 = vmatpush1.xpose.msra.mxu0 %v818
        %856 = vmatprep.subr.mxu0 0.0
        %857 = vmatpush1.xpose.msra.mxu0 %v819
        %858 = vmatprep.subr.mxu0 0.0
        %859 = vmatpush1.xpose.msra.mxu0 %v820
        %860 = vmatprep.subr.mxu0 0.0
        %861 = vmatpush1.xpose.msra.mxu0 %v821
        %862 = vmatprep.subr.mxu0 0.0
        %863 = vmatpush1.xpose.msra.mxu0 %v822
        %864 = vmatprep.subr.mxu0 0.0
        %865 = vmatpush1.xpose.msra.mxu0 0.0
        %866 = vmatprep.subr.mxu0 0.0
        %867 = vmatpush1.xpose.msra.mxu0 0.0
        %868 = vmatprep.subr.mxu0 0.0
        %869 = vmatpush1.xpose.msra.mxu0 0.0
        %870 = vmatprep.subr.mxu0 0.0
        %871 = vmatpush1.xpose.msra.mxu0 0.0
        %872 = vmatprep.subr.mxu0 0.0
        %873 = vmatpush1.xpose.msra.mxu0 0.0
        %874 = vmatprep.subr.mxu0 0.0
        %875 = vmatpush1.xpose.msra.mxu0 0.0
        %876 = vmatprep.subr.mxu0 0.0
        %877 = vmatpush1.xpose.msra.mxu0 0.0
        %878 = vmatprep.subr.mxu0 0.0
        %879 = vmatpush1.xpose.msra.mxu0 0.0
        %880 = vmatprep.subr.mxu0 0.0
        %881 = vmatpush1.xpose.msra.mxu0 0.0
        %882 = vmatprep.subr.mxu0 0.0
        %883 = vmatpush1.xpose.msra.mxu0 0.0
        %884 = vmatprep.subr.mxu0 0.0
        %885 = vmatpush1.xpose.msra.mxu0 0.0
        %886 = vmatprep.subr.mxu0 0.0
        %887 = vmatpush1.xpose.msra.mxu0 0.0
        %888 = vmatprep.subr.mxu0 0.0
        %889 = vmatpush1.xpose.msra.mxu0 0.0
        %890 = vmatprep.subr.mxu0 0.0
        %891 = vmatpush1.xpose.msra.mxu0 0.0
        %892 = vmatprep.subr.mxu0 0.0
        %893 = vmatpush1.xpose.msra.mxu0 0.0
        %894 = vmatprep.subr.mxu0 0.0
        %895 = vmatpush1.xpose.msra.mxu0 0.0
        %896 = vmatprep.subr.mxu0 0.0
        %897 = vmatpush1.xpose.msra.mxu0 0.0
        %898 = vmatprep.subr.mxu0 0.0
        %899 = vmatpush1.xpose.msra.mxu0 0.0
        %900 = vmatprep.subr.mxu0 0.0
        %901 = vmatpush1.xpose.msra.mxu0 0.0
        %902 = vmatprep.subr.mxu0 0.0
        %903 = vmatpush1.xpose.msra.mxu0 0.0
        %904 = vmatprep.subr.mxu0 0.0
        %905 = vmatpush1.xpose.msra.mxu0 0.0
        %906 = vmatprep.subr.mxu0 0.0
        %907 = vmatpush1.xpose.msra.mxu0 0.0
        %908 = vmatprep.subr.mxu0 0.0
        %909 = vmatpush1.xpose.msra.mxu0 0.0
        %910 = vmatprep.subr.mxu0 0.0
        %911 = vmatpush1.xpose.msra.mxu0 0.0
        %912 = vmatprep.subr.mxu0 0.0
        %913 = vmatpush1.xpose.msra.mxu0 0.0
        %914 = vmatprep.subr.mxu0 0.0
        %915 = vmatpush1.xpose.msra.mxu0 0.0
        %916 = vmatprep.mubr.f32.mxu0 0.0
        %917 = vmatmul.mubr.f32.gmra.mrb[0].mxu0 %v840
        %v918 = vpop.f32.mrb[0].mxu0
        %v919 = vadd.f32 0.0, %v918
        %v920 = vpop.f32.mrb[0].mxu0
        %921 = vmatprep.mubr.f32.mxu0 0.0
        %922 = vmatmul.mubr.f32.gmra.mrb[0].mxu0 %v841
        %v923 = vpop.f32.mrb[0].mxu0
        %v924 = vadd.f32 0.0, %v923
        %v925 = vpop.f32.mrb[0].mxu0
        %926 = vmatprep.mubr.f32.mxu0 0.0
        %927 = vmatmul.mubr.f32.gmra.mrb[0].mxu0 %v842
        %v928 = vpop.f32.mrb[0].mxu0
        %v929 = vadd.f32 0.0, %v928
        %v930 = vpop.f32.mrb[0].mxu0
        %931 = vmatprep.mubr.f32.mxu0 0.0
        %932 = vmatmul.mubr.f32.gmra.mrb[0].mxu0 %v843
        %v933 = vpop.f32.mrb[0].mxu0
        %v934 = vadd.f32 0.0, %v933
        %v935 = vpop.f32.mrb[0].mxu0
        %936 = vmatprep.mubr.f32.mxu0 0.0
        %937 = vmatmul.mubr.f32.gmra.mrb[0].mxu0 %v844
        %v938 = vpop.f32.mrb[0].mxu0
        %v939 = vadd.f32 0.0, %v938
        %v940 = vpop.f32.mrb[0].mxu0
        %941 = vmatprep.mubr.f32.mxu0 0.0
        %942 = vmatmul.mubr.f32.gmra.mrb[0].mxu0 %v845
        %v943 = vpop.f32.mrb[0].mxu0
        %v944 = vadd.f32 0.0, %v943
        %v945 = vpop.f32.mrb[0].mxu0
        %946 = vdwg.mxu0
        %v947 = vadd.f32 %v846, %v919
        %v948 = vadd.f32 %v847, %v924
        %v949 = vadd.f32 %v848, %v929
        %v950 = vadd.f32 %v849, %v934
        %v951 = vadd.f32 %v850, %v939
        %v952 = vadd.f32 %v851, %v944
        %vm953 = vcmask 392192
        %954 = vst.msk [vmem:[#allocation2] sm:$0xff] %vm953, %v947
        %955 = vst.msk [vmem:[#allocation2 + $0x8] sm:$0xff] %vm953, %v948
        %956 = vst.msk [vmem:[#allocation2 + $0x10] sm:$0xff] %vm953, %v949
        %957 = vst.msk [vmem:[#allocation2 + $0x18] sm:$0xff] %vm953, %v950
        %958 = vst.msk [vmem:[#allocation2 + $0x20] sm:$0xff] %vm953, %v951
        %959 = vst.msk [vmem:[#allocation2 + $0x28] sm:$0xff] %vm953, %v952
        %p960 = scmp.eq.s32.totalorder %s25, 1
        // Predicated region
        $region81: #{tpu_custom_call.1} parent=71 // pred_check
          %p961 = pneg %p960
        $region82: #{tpu_custom_call.1} parent=71 // pred_check_branch
          %963 = sbr.rel (%p961) target = $region84
        $region83: #{tpu_custom_call.1} parent=71 // pred_region
          %v964 = vld [vmem:[#allocation2] sm:$0xff]
          %v965 = vld [vmem:[#allocation2 + $0x8] sm:$0xff]
          %v966 = vld [vmem:[#allocation2 + $0x10] sm:$0xff]
          %v967 = vld [vmem:[#allocation2 + $0x18] sm:$0xff]
          %v968 = vld [vmem:[#allocation2 + $0x20] sm:$0xff]
          %v969 = vld [vmem:[#allocation2 + $0x28] sm:$0xff]
          %vm970 = vcmp.ne.f32.partialorder %v964, 0.0
          %vm971 = vcmp.ne.f32.partialorder %v965, 0.0
          %vm972 = vcmp.ne.f32.partialorder %v966, 0.0
          %vm973 = vcmp.ne.f32.partialorder %v967, 0.0
          %vm974 = vcmp.ne.f32.partialorder %v968, 0.0
          %vm975 = vcmp.ne.f32.partialorder %v969, 0.0
          %v976 = vsel %vm970, %v964, 1.0
          %v977 = vsel %vm971, %v965, 1.0
          %v978 = vsel %vm972, %v966, 1.0
          %v979 = vsel %vm973, %v967, 1.0
          %v980 = vsel %vm974, %v968, 1.0
          %v981 = vsel %vm975, %v969, 1.0
          %988 = vrot.lane.b32.xlu0 %v976, 20
          %v989 = vpop.permute.xlu0 %988
          %990 = vrot.lane.b32.xlu0 %v977, 20
          %v991 = vpop.permute.xlu0 %990
          %992 = vrot.lane.b32.xlu0 %v978, 20
          %v993 = vpop.permute.xlu0 %992
          %994 = vrot.lane.b32.xlu0 %v979, 20
          %v995 = vpop.permute.xlu0 %994
          %996 = vrot.lane.b32.xlu0 %v980, 20
          %v997 = vpop.permute.xlu0 %996
          %998 = vrot.lane.b32.xlu0 %v981, 20
          %v999 = vpop.permute.xlu0 %998
          %v1006 = vrcp.pop %v989
          %v1007 = vmul.f32 %v964, %v1006
          %v1008 = vrcp.pop %v991
          %v1009 = vmul.f32 %v965, %v1008
          %v1010 = vrcp.pop %v993
          %v1011 = vmul.f32 %v966, %v1010
          %v1012 = vrcp.pop %v995
          %v1013 = vmul.f32 %v967, %v1012
          %v1014 = vrcp.pop %v997
          %v1015 = vmul.f32 %v968, %v1014
          %v1016 = vrcp.pop %v999
          %v1017 = vmul.f32 %v969, %v1016
          %v1018 = vmul.f32 %v964, 0.01
          %v1019 = vmul.f32 %v965, 0.01
          %v1020 = vmul.f32 %v966, 0.01
          %v1021 = vmul.f32 %v967, 0.01
          %v1022 = vmul.f32 %v968, 0.01
          %v1023 = vmul.f32 %v969, 0.01
          %1025 = vset.pattern.permute.xlu0 40
          %1026 = vperm.xlu0 %1025, %v1018
          %v1027 = vpop.permute.xlu0 %1026
          %1030 = vset.pattern.permute.xlu0 40
          %1031 = vperm.xlu0 %1030, %v1019
          %v1032 = vpop.permute.xlu0 %1031
          %1035 = vset.pattern.permute.xlu0 40
          %1036 = vperm.xlu0 %1035, %v1020
          %v1037 = vpop.permute.xlu0 %1036
          %1040 = vset.pattern.permute.xlu0 40
          %1041 = vperm.xlu0 %1040, %v1021
          %v1042 = vpop.permute.xlu0 %1041
          %1045 = vset.pattern.permute.xlu0 40
          %1046 = vperm.xlu0 %1045, %v1022
          %v1047 = vpop.permute.xlu0 %1046
          %1050 = vset.pattern.permute.xlu0 40
          %1051 = vperm.xlu0 %1050, %v1023
          %v1052 = vpop.permute.xlu0 %1051
          %1060 = vrot.lane.b32.xlu0 %v1007, 108
          %v1061 = vpop.permute.xlu0 %1060
          %1062 = vrot.lane.b32.xlu0 %v1009, 108
          %v1063 = vpop.permute.xlu0 %1062
          %1064 = vrot.lane.b32.xlu0 %v1011, 108
          %v1065 = vpop.permute.xlu0 %1064
          %1066 = vrot.lane.b32.xlu0 %v1013, 108
          %v1067 = vpop.permute.xlu0 %1066
          %1068 = vrot.lane.b32.xlu0 %v1015, 108
          %v1069 = vpop.permute.xlu0 %1068
          %1070 = vrot.lane.b32.xlu0 %v1017, 108
          %v1071 = vpop.permute.xlu0 %1070
          %v1078 = vsel %vm970, %v1061, %v1027
          %v1079 = vsel %vm971, %v1063, %v1032
          %v1080 = vsel %vm972, %v1065, %v1037
          %v1081 = vsel %vm973, %v1067, %v1042
          %v1082 = vsel %vm974, %v1069, %v1047
          %v1083 = vsel %vm975, %v1071, %v1052
          %v1084 = vld [vmem:[%s5] sm:$0xff]
          %v1085 = vld [vmem:[%s5 + $0x8] sm:$0xff]
          %v1086 = vld [vmem:[%s5 + $0x10] sm:$0xff]
          %v1087 = vld [vmem:[%s5 + $0x18] sm:$0xff]
          %v1088 = vld [vmem:[%s5 + $0x20] sm:$0xff]
          %v1089 = vld [vmem:[%s5 + $0x28] sm:$0xff]
          %v1090 = vld [vmem:[%s10] sm:$0x1]
          %1092 = vset.pattern.permute.xlu0 0
          %1093 = vperm.xlu0 %1092, %v1084
          %v1094 = vpop.permute.xlu0 %1093
          %1097 = vset.pattern.permute.xlu0 0
          %1098 = vperm.xlu0 %1097, %v1085
          %v1099 = vpop.permute.xlu0 %1098
          %1102 = vset.pattern.permute.xlu0 0
          %1103 = vperm.xlu0 %1102, %v1086
          %v1104 = vpop.permute.xlu0 %1103
          %1107 = vset.pattern.permute.xlu0 0
          %1108 = vperm.xlu0 %1107, %v1087
          %v1109 = vpop.permute.xlu0 %1108
          %1112 = vset.pattern.permute.xlu0 0
          %1113 = vperm.xlu0 %1112, %v1088
          %v1114 = vpop.permute.xlu0 %1113
          %1117 = vset.pattern.permute.xlu0 0
          %1118 = vperm.xlu0 %1117, %v1089
          %v1119 = vpop.permute.xlu0 %1118
          %v1122 = vlaneseq
          %v1123 = vshrl.u32 %v1122, 7
          %v1124 = vsub.s32 0, %v1123
          %v1125 = vrot.slane %v1090, %v1124
          %v1127 = vmul.f32 %v1094, %v1125
          %v1128 = vmul.f32 %v1099, %v1125
          %v1129 = vmul.f32 %v1104, %v1125
          %v1130 = vmul.f32 %v1109, %v1125
          %v1131 = vmul.f32 %v1114, %v1125
          %v1132 = vmul.f32 %v1119, %v1125
          %v1133 = vld [vmem:[%s11] sm:$0xff]
          %v1134 = vld [vmem:[%s11 + $0x8] sm:$0xff]
          %v1135 = vld [vmem:[%s11 + $0x10] sm:$0xf]
          %vm1136 = vcmask 162816
          %v1138 = vsel %vm1136, %v1078, 0
          %v1141 = vsel %vm1136, %v1079, 0
          %v1144 = vsel %vm1136, %v1080, 0
          %v1147 = vsel %vm1136, %v1081, 0
          %v1150 = vsel %vm1136, %v1082, 0
          %v1153 = vsel %vm1136, %v1083, 0
          %vm1155 = vcmask 1043456
          %v1157 = vsel %vm1155, %v1135, 0
          %1159 = vmatprep.subr.mxu0 0.0
          %1160 = vmatpush1.msra.mxu0 %v1133
          %1161 = vmatprep.subr.mxu0 0.0
          %1162 = vmatpush1.msra.mxu0 %v1134
          %1163 = vmatprep.subr.mxu0 0.0
          %1164 = vmatpush1.msra.mxu0 %v1157
          %1165 = vmatprep.subr.mxu0 0.0
          %1166 = vmatpush1.msra.mxu0 0.0
          %1167 = vmatprep.subr.mxu0 0.0
          %1168 = vmatpush1.msra.mxu0 0.0
          %1169 = vmatprep.subr.mxu0 0.0
          %1170 = vmatpush1.msra.mxu0 0.0
          %1171 = vmatprep.subr.mxu0 0.0
          %1172 = vmatpush1.msra.mxu0 0.0
          %1173 = vmatprep.subr.mxu0 0.0
          %1174 = vmatpush1.msra.mxu0 0.0
          %1175 = vmatprep.subr.mxu0 0.0
          %1176 = vmatpush1.msra.mxu0 0.0
          %1177 = vmatprep.subr.mxu0 0.0
          %1178 = vmatpush1.msra.mxu0 0.0
          %1179 = vmatprep.subr.mxu0 0.0
          %1180 = vmatpush1.msra.mxu0 0.0
          %1181 = vmatprep.subr.mxu0 0.0
          %1182 = vmatpush1.msra.mxu0 0.0
          %1183 = vmatprep.subr.mxu0 0.0
          %1184 = vmatpush1.msra.mxu0 0.0
          %1185 = vmatprep.subr.mxu0 0.0
          %1186 = vmatpush1.msra.mxu0 0.0
          %1187 = vmatprep.subr.mxu0 0.0
          %1188 = vmatpush1.msra.mxu0 0.0
          %1189 = vmatprep.subr.mxu0 0.0
          %1190 = vmatpush1.msra.mxu0 0.0
          %1191 = vmatprep.subr.mxu0 0.0
          %1192 = vmatpush1.msra.mxu0 0.0
          %1193 = vmatprep.subr.mxu0 0.0
          %1194 = vmatpush1.msra.mxu0 0.0
          %1195 = vmatprep.subr.mxu0 0.0
          %1196 = vmatpush1.msra.mxu0 0.0
          %1197 = vmatprep.subr.mxu0 0.0
          %1198 = vmatpush1.msra.mxu0 0.0
          %1199 = vmatprep.subr.mxu0 0.0
          %1200 = vmatpush1.msra.mxu0 0.0
          %1201 = vmatprep.subr.mxu0 0.0
          %1202 = vmatpush1.msra.mxu0 0.0
          %1203 = vmatprep.subr.mxu0 0.0
          %1204 = vmatpush1.msra.mxu0 0.0
          %1205 = vmatprep.subr.mxu0 0.0
          %1206 = vmatpush1.msra.mxu0 0.0
          %1207 = vmatprep.subr.mxu0 0.0
          %1208 = vmatpush1.msra.mxu0 0.0
          %1209 = vmatprep.subr.mxu0 0.0
          %1210 = vmatpush1.msra.mxu0 0.0
          %1211 = vmatprep.subr.mxu0 0.0
          %1212 = vmatpush1.msra.mxu0 0.0
          %1213 = vmatprep.subr.mxu0 0.0
          %1214 = vmatpush1.msra.mxu0 0.0
          %1215 = vmatprep.subr.mxu0 0.0
          %1216 = vmatpush1.msra.mxu0 0.0
          %1217 = vmatprep.subr.mxu0 0.0
          %1218 = vmatpush1.msra.mxu0 0.0
          %1219 = vmatprep.subr.mxu0 0.0
          %1220 = vmatpush1.msra.mxu0 0.0
          %1221 = vmatprep.subr.mxu0 0.0
          %1222 = vmatpush1.msra.mxu0 0.0
          %1223 = vmatprep.mubr.f32.mxu0 0.0
          %1224 = vmatmul.mubr.f32.gmra.mrb[0].mxu0 %v1138
          %v1225 = vpop.f32.mrb[0].mxu0
          %v1226 = vadd.f32 0.0, %v1225
          %v1227 = vpop.f32.mrb[0].mxu0
          %1228 = vmatprep.mubr.f32.mxu0 0.0
          %1229 = vmatmul.mubr.f32.gmra.mrb[0].mxu0 %v1141
          %v1230 = vpop.f32.mrb[0].mxu0
          %v1231 = vadd.f32 0.0, %v1230
          %v1232 = vpop.f32.mrb[0].mxu0
          %1233 = vmatprep.mubr.f32.mxu0 0.0
          %1234 = vmatmul.mubr.f32.gmra.mrb[0].mxu0 %v1144
          %v1235 = vpop.f32.mrb[0].mxu0
          %v1236 = vadd.f32 0.0, %v1235
          %v1237 = vpop.f32.mrb[0].mxu0
          %1238 = vmatprep.mubr.f32.mxu0 0.0
          %1239 = vmatmul.mubr.f32.gmra.mrb[0].mxu0 %v1147
          %v1240 = vpop.f32.mrb[0].mxu0
          %v1241 = vadd.f32 0.0, %v1240
          %v1242 = vpop.f32.mrb[0].mxu0
          %1243 = vmatprep.mubr.f32.mxu0 0.0
          %1244 = vmatmul.mubr.f32.gmra.mrb[0].mxu0 %v1150
          %v1245 = vpop.f32.mrb[0].mxu0
          %v1246 = vadd.f32 0.0, %v1245
          %v1247 = vpop.f32.mrb[0].mxu0
          %1248 = vmatprep.mubr.f32.mxu0 0.0
          %1249 = vmatmul.mubr.f32.gmra.mrb[0].mxu0 %v1153
          %v1250 = vpop.f32.mrb[0].mxu0
          %v1251 = vadd.f32 0.0, %v1250
          %v1252 = vpop.f32.mrb[0].mxu0
          %1253 = vdwg.mxu0
          %v1254 = vadd.f32 %v1127, %v1226
          %v1255 = vadd.f32 %v1128, %v1231
          %v1256 = vadd.f32 %v1129, %v1236
          %v1257 = vadd.f32 %v1130, %v1241
          %v1258 = vadd.f32 %v1131, %v1246
          %v1259 = vadd.f32 %v1132, %v1251
          %v1260 = vld [vmem:[%s12] sm:$0x1]
          %v1262 = vlaneseq
          %v1263 = vshrl.u32 %v1262, 7
          %v1264 = vsub.s32 0, %v1263
          %v1265 = vrot.slane %v1260, %v1264
          %v1267 = vadd.f32 %v1254, %v1265
          %v1268 = vadd.f32 %v1255, %v1265
          %v1269 = vadd.f32 %v1256, %v1265
          %v1270 = vadd.f32 %v1257, %v1265
          %v1271 = vadd.f32 %v1258, %v1265
          %v1272 = vadd.f32 %v1259, %v1265
          %v1273 = vxor.u32 %v1267, 2147483648
          %v1274 = vxor.u32 %v1268, 2147483648
          %v1275 = vxor.u32 %v1269, 2147483648
          %v1276 = vxor.u32 %v1270, 2147483648
          %v1277 = vxor.u32 %v1271, 2147483648
          %v1278 = vxor.u32 %v1272, 2147483648
          %v1279 = vmul.f32 %v1273, 1.442695
          %v1280 = vpow.pop %v1279
          %v1281 = vmul.f32 %v1274, 1.442695
          %v1282 = vpow.pop %v1281
          %v1283 = vmul.f32 %v1275, 1.442695
          %v1284 = vpow.pop %v1283
          %v1285 = vmul.f32 %v1276, 1.442695
          %v1286 = vpow.pop %v1285
          %v1287 = vmul.f32 %v1277, 1.442695
          %v1288 = vpow.pop %v1287
          %v1289 = vmul.f32 %v1278, 1.442695
          %v1290 = vpow.pop %v1289
          %v1291 = vadd.f32 %v1280, 1.0
          %v1292 = vadd.f32 %v1282, 1.0
          %v1293 = vadd.f32 %v1284, 1.0
          %v1294 = vadd.f32 %v1286, 1.0
          %v1295 = vadd.f32 %v1288, 1.0
          %v1296 = vadd.f32 %v1290, 1.0
          %v1297 = vrcp.pop %v1291
          %v1298 = vmul.f32 1.0, %v1297
          %v1299 = vrcp.pop %v1292
          %v1300 = vmul.f32 1.0, %v1299
          %v1301 = vrcp.pop %v1293
          %v1302 = vmul.f32 1.0, %v1301
          %v1303 = vrcp.pop %v1294
          %v1304 = vmul.f32 1.0, %v1303
          %v1305 = vrcp.pop %v1295
          %v1306 = vmul.f32 1.0, %v1305
          %v1307 = vrcp.pop %v1296
          %v1308 = vmul.f32 1.0, %v1307
          %1309 = vst.msk [vmem:[%s13] sm:$0xff] %vm1136, %v1298
          %1310 = vst.msk [vmem:[%s13 + $0x8] sm:$0xff] %vm1136, %v1300
          %1311 = vst.msk [vmem:[%s13 + $0x10] sm:$0xff] %vm1136, %v1302
          %1312 = vst.msk [vmem:[%s13 + $0x18] sm:$0xff] %vm1136, %v1304
          %1313 = vst.msk [vmem:[%s13 + $0x20] sm:$0xff] %vm1136, %v1306
          %1314 = vst.msk [vmem:[%s13 + $0x28] sm:$0xff] %vm1136, %v1308
          %1315 = vrot.lane.b32.xlu0 %v1078, 20
          %v1316 = vpop.permute.xlu0 %1315
          %1317 = vrot.lane.b32.xlu0 %v1079, 20
          %v1318 = vpop.permute.xlu0 %1317
          %1319 = vrot.lane.b32.xlu0 %v1080, 20
          %v1320 = vpop.permute.xlu0 %1319
          %1321 = vrot.lane.b32.xlu0 %v1081, 20
          %v1322 = vpop.permute.xlu0 %1321
          %1323 = vrot.lane.b32.xlu0 %v1082, 20
          %v1324 = vpop.permute.xlu0 %1323
          %1325 = vrot.lane.b32.xlu0 %v1083, 20
          %v1326 = vpop.permute.xlu0 %1325
          %vm1333 = vcmask 326816
          %1334 = vst.msk [vmem:[%s13] sm:$0xff] %vm1333, %v1316
          %1335 = vst.msk [vmem:[%s13 + $0x8] sm:$0xff] %vm1333, %v1318
          %1336 = vst.msk [vmem:[%s13 + $0x10] sm:$0xff] %vm1333, %v1320
          %1337 = vst.msk [vmem:[%s13 + $0x18] sm:$0xff] %vm1333, %v1322
          %1338 = vst.msk [vmem:[%s13 + $0x20] sm:$0xff] %vm1333, %v1324
          %1339 = vst.msk [vmem:[%s13 + $0x28] sm:$0xff] %vm1333, %v1326
        $region84: #{tpu_custom_call.1} parent=71 // pred_fallthru
          _
        // Predicated region
        $region85: #{tpu_custom_call.1} parent=71 // pred_check
          %p1340 = pneg %p331
        $region86: #{tpu_custom_call.1} parent=71 // pred_check_branch
          %1342 = sbr.rel (%p1340) target = $region88
        $region87: #{tpu_custom_call.1} parent=71 // pred_region
          _
        $region88: #{tpu_custom_call.1} parent=71 // pred_fallthru
          _
        // Predicated region
        $region89: #{tpu_custom_call.1} parent=71 // pred_check
          %p1343 = pneg %p331
        $region90: #{tpu_custom_call.1} parent=71 // pred_check_branch
          %1345 = sbr.rel (%p1343) target = $region92
        $region91: #{tpu_custom_call.1} parent=71 // pred_region
          _
        $region92: #{tpu_custom_call.1} parent=71 // pred_fallthru
          _
      $region72: #{tpu_custom_call.1} parent=5 // pred_fallthru
        _
      %p1346 = scmp.le.s32.totalorder 2, %s20
      // Predicated region
      $region93: #{tpu_custom_call.1} parent=5 // pred_check
        %p1347 = pneg %p1346
      $region94: #{tpu_custom_call.1} parent=5 // pred_check_branch
        %1349 = sbr.rel (%p1347) target = $region96
      $region95: #{tpu_custom_call.1} parent=5 // pred_region
        %s1350 = ssub.s32 %s20, 2
      $region96: #{tpu_custom_call.1} parent=5 // pred_fallthru
        _
    $region6: #{tpu_custom_call.1} parent=1 // loop_footer
      %s24 = sadd.s32 1, %s20
    $region7: #{tpu_custom_call.1} parent=1 // loop_footer_branch
      %19 = sbr.rel target = $region3
    $region8: #{tpu_custom_call.1} parent=1 // loop_exit
      _
    %1351 = vsyncpa [#allocation4], 1
    %s1352 = scalar_lea.sflag [#allocation4], 1
    %1353 = vsyncpa %s1352, 1

</llo_original>
